<compile_context>
chip_gen: v6e
topology: v6e:2x2x1
jax: 0.10.0
libtpu: 0.0.40
codegen_flags: <defaults>
</compile_context>

<pallas_src>
import functools

import jax
import jax.numpy as jnp
from jax.experimental import pallas as pl
from jax.experimental.pallas import tpu as pltpu

IN_DIM = 2
HIDDEN = 50
OUT_DIM = 5
N_MID = 4

PAD = 128        # lane-padded hidden width (50 -> 128)
OUT_PAD = 8      # narrow, lane-aligned output width (5 -> 8)
MAX_TM = 2048    # max batch tile; big tiles amortize per-step weight pushes


def _silu(x, impl):
    """x * sigmoid(x).

    impl="tanh": single EUP op, sigmoid(x) = 0.5*(tanh(x/2)+1). Default.
    impl="exp":  exact logistic form (exp + true divide), used for the tight
                 structural correctness check against the pure-JAX reference.
    """
    if impl == "tanh":
        return x * (0.5 * jnp.tanh(0.5 * x) + 0.5)
    return x * (1.0 / (1.0 + jnp.exp(-x)))


def _mlp_kernel(x_ref, w_in_ref, b_in_ref, w_mid_ref, b_mid_ref,
                w_out_ref, b_out_ref, o_ref, *, silu_impl="tanh"):
    """One batch tile of the full MLP forward. All refs live in VMEM.

    x_ref:     (TM, IN_DIM)       unpadded input tile (2 lanes)
    w_in_ref:  (IN_DIM, PAD)      layer_in weight, (in, out) layout, f32
    b_in_ref:  (1, PAD)           f32
    w_mid_ref: (N_MID, PAD, PAD)  middle weights, (in, out) layout (bf16/f32)
    b_mid_ref: (N_MID, 1, PAD)    f32
    w_out_ref: (PAD, PAD)         padded output weight (first OUT_PAD cols valid)
    b_out_ref: (1, OUT_PAD)       f32
    o_ref:     (TM, OUT_PAD)      narrow output tile (first OUT_DIM lanes valid)
    """
    x = x_ref[...]
    # First layer: K=2 contraction -> two VPU broadcast-FMAs (no MXU work).
    h = (x[:, 0:1] * w_in_ref[0:1, :]
         + x[:, 1:2] * w_in_ref[1:2, :]
         + b_in_ref[...])
    h = _silu(h, silu_impl)

    w_dtype = w_mid_ref.dtype
    for m in range(N_MID):  # static unroll over the 4 middle layers
        h = jnp.dot(h.astype(w_dtype), w_mid_ref[m],
                    preferred_element_type=jnp.float32)
        h = _silu(h + b_mid_ref[m], silu_impl)

    y = jnp.dot(h.astype(w_out_ref.dtype), w_out_ref[...],
                preferred_element_type=jnp.float32)
    # Narrow store: only the first OUT_PAD lanes go back to HBM.
    o_ref[...] = y[:, :OUT_PAD] + b_out_ref[...]


def _pad2(w, rows, cols, dtype=jnp.float32):
    out = jnp.zeros((rows, cols), dtype)
    return out.at[:w.shape[0], :w.shape[1]].set(w.astype(dtype))


def _pad1(b, cols, dtype=jnp.float32):
    out = jnp.zeros((cols,), dtype)
    return out.at[:b.shape[0]].set(b.astype(dtype))


def _choose_tm(n):
    """Largest tile <= MAX_TM that keeps the grid reasonably deep.

    Prefer >= 4 grid steps (down to 256 rows) so v7x's 2 TensorCores get
    comparable real (non-padded) work, then >= 2 steps down to 128 rows.
    """
    tm = MAX_TM
    while tm > 256 and n < 4 * tm:
        tm //= 2
    while tm > 128 and n < 2 * tm:
        tm //= 2
    return tm


@functools.partial(jax.jit, static_argnames=("matmul_dtype", "silu_impl"))
def pinn_forward(x, params, *, matmul_dtype=jnp.bfloat16, silu_impl="tanh"):
    """x: (N, 2) float32 -> (N, 5) float32 via a single Pallas kernel.

    matmul_dtype: jnp.bfloat16 (default; MXU-native fast path, f32 accumulate)
      or jnp.float32 (exact, slower: f32 operands are MXU-emulated).
    silu_impl: "tanh" (default, single EUP op) or "exp" (exact logistic form).
    """
    n = x.shape[0]
    (w_in, b_in, w_mid, b_mid, w_out, b_out) = params

    tm = _choose_tm(n)
    grid = pl.cdiv(n, tm)
    n_pad = grid * tm
    if n_pad != n:
        # Ragged batch: pad rows of the narrow (N,2) input (8 B/row) and slice
        # the extra rows off below. Zero rows flow harmlessly through the MLP.
        x = jnp.zeros((n_pad, IN_DIM), x.dtype).at[:n].set(x)

    # Weight packing (glue, outside the kernel). Hidden weights in (in, out)
    # layout padded to 128 lanes, cast to matmul_dtype. First-layer weight and
    # all biases stay f32 (VPU FMA path and f32 bias adds).
    w_in_p = _pad2(w_in.T, IN_DIM, PAD)                                # (2,128)
    b_in_p = _pad1(b_in, PAD)[None, :]                                 # (1,128)
    w_mid_p = jnp.stack([_pad2(w.T, PAD, PAD, matmul_dtype) for w in w_mid])
    b_mid_p = jnp.stack([_pad1(b, PAD)[None, :] for b in b_mid])       # (4,1,128)
    w_out_p = _pad2(w_out.T, PAD, PAD, matmul_dtype)                   # (128,128)
    b_out_p = _pad1(b_out, OUT_PAD)[None, :]                           # (1,8)

    kernel = functools.partial(_mlp_kernel, silu_impl=silu_impl)

    out_p = pl.pallas_call(
        kernel,
        out_shape=jax.ShapeDtypeStruct((n_pad, OUT_PAD), jnp.float32),
        grid_spec=pltpu.PrefetchScalarGridSpec(
            num_scalar_prefetch=0,
            grid=(grid,),
            in_specs=[
                pl.BlockSpec((tm, IN_DIM), lambda i: (i, 0)),           # x tile
                pl.BlockSpec((IN_DIM, PAD), lambda i: (0, 0)),          # w_in
                pl.BlockSpec((1, PAD), lambda i: (0, 0)),               # b_in
                pl.BlockSpec((N_MID, PAD, PAD), lambda i: (0, 0, 0)),   # w_mid
                pl.BlockSpec((N_MID, 1, PAD), lambda i: (0, 0, 0)),     # b_mid
                pl.BlockSpec((PAD, PAD), lambda i: (0, 0)),             # w_out
                pl.BlockSpec((1, OUT_PAD), lambda i: (0, 0)),           # b_out
            ],
            out_specs=pl.BlockSpec((tm, OUT_PAD), lambda i: (i, 0)),
        ),
        compiler_params=pltpu.CompilerParams(
            dimension_semantics=("parallel",)),
    )(x, w_in_p, b_in_p, w_mid_p, b_mid_p, w_out_p, b_out_p)

    return out_p[:n, :OUT_DIM]


def init_params(key):
    """Deterministic init matching nn.Linear shapes (uniform +-1/sqrt(fan_in))."""
    keys = jax.random.split(key, 2 * (2 + N_MID))

    def linear(kw, kb, fan_in, fan_out):
        bound = 1.0 / jnp.sqrt(fan_in)
        w = jax.random.uniform(kw, (fan_out, fan_in), jnp.float32, -bound, bound)
        b = jax.random.uniform(kb, (fan_out,), jnp.float32, -bound, bound)
        return w, b

    w_in, b_in = linear(keys[0], keys[1], IN_DIM, HIDDEN)
    w_mid, b_mid = [], []
    for m in range(N_MID):
        w, b = linear(keys[2 + 2 * m], keys[3 + 2 * m], HIDDEN, HIDDEN)
        w_mid.append(w)
        b_mid.append(b)
    w_out, b_out = linear(keys[2 + 2 * N_MID], keys[3 + 2 * N_MID], HIDDEN, OUT_DIM)
    return (w_in, b_in, w_mid, b_mid, w_out, b_out)


def reference_forward(x, params):
    (w_in, b_in, w_mid, b_mid, w_out, b_out) = params
    h = jax.nn.silu(x @ w_in.T + b_in)
    for w, b in zip(w_mid, b_mid):
        h = jax.nn.silu(h @ w.T + b)
    return h @ w_out.T + b_out


if __name__ == "__main__":
    key = jax.random.PRNGKey(0)
    k_param, k_x = jax.random.split(key)
    params = init_params(k_param)

    N = 257  # small, and deliberately NOT a multiple of the tile size
    x = jax.random.uniform(k_x, (N, IN_DIM), jnp.float32)

    y_ref = reference_forward(x, params)

    # 1) Exact f32 matmuls + exact logistic SiLU: tight structural check.
    y_exact = jax.block_until_ready(
        pinn_forward(x, params, matmul_dtype=jnp.float32, silu_impl="exp"))
    assert y_exact.shape == (N, OUT_DIM)
    assert jnp.allclose(y_exact, y_ref, atol=1e-5, rtol=1e-5), "exact mismatch"

    # 2) Default fast path: bf16 MXU operands (f32 accumulation) + tanh-form
    #    sigmoid. Tolerance reflects bf16 operand rounding across 5 matmuls.
    y_fast = jax.block_until_ready(pinn_forward(x, params))
    assert y_fast.shape == (N, OUT_DIM)
    assert jnp.allclose(y_fast, y_ref, atol=5e-2, rtol=5e-2), "bf16 mismatch"

    print("KERNEL_OK")
</pallas_src>

<mosaic_0001>
module attributes {stable_mosaic.version = 11 : i64} {
  func.func @_mlp_kernel(%arg0: i32, %arg1: memref<128x2xf32, #tpu.memory_space<vmem>>, %arg2: memref<2x128xf32, #tpu.memory_space<vmem>>, %arg3: memref<1x128xf32, #tpu.memory_space<vmem>>, %arg4: memref<4x128x128xf32, #tpu.memory_space<vmem>>, %arg5: memref<4x1x128xf32, #tpu.memory_space<vmem>>, %arg6: memref<128x128xf32, #tpu.memory_space<vmem>>, %arg7: memref<1x8xf32, #tpu.memory_space<vmem>>, %arg8: memref<128x8xf32, #tpu.memory_space<vmem>>) attributes {dimension_semantics = [#tpu.dimension_semantics<parallel>], iteration_bounds = array<i64: 3>, scalar_prefetch = 0 : i64, scratch_operands = 0 : i64, tpu.core_type = #tpu.core_type<tc>, window_params = [{transform_indices = @transform_0, window_bounds = array<i64: 128, 2>}, {pipeline_mode = #tpu.pipeline_mode<synchronous>, transform_indices = @transform_1, window_bounds = array<i64: 2, 128>}, {pipeline_mode = #tpu.pipeline_mode<synchronous>, transform_indices = @transform_2, window_bounds = array<i64: 1, 128>}, {pipeline_mode = #tpu.pipeline_mode<synchronous>, transform_indices = @transform_3, window_bounds = array<i64: 4, 128, 128>}, {pipeline_mode = #tpu.pipeline_mode<synchronous>, transform_indices = @transform_4, window_bounds = array<i64: 4, 1, 128>}, {pipeline_mode = #tpu.pipeline_mode<synchronous>, transform_indices = @transform_5, window_bounds = array<i64: 128, 128>}, {pipeline_mode = #tpu.pipeline_mode<synchronous>, transform_indices = @transform_6, window_bounds = array<i64: 1, 8>}, {transform_indices = @transform_7, window_bounds = array<i64: 128, 8>}]} {
    %c0 = arith.constant 0 : index
    %c0_0 = arith.constant 0 : index
    %0 = vector.load %arg1[%c0, %c0_0] : memref<128x2xf32, #tpu.memory_space<vmem>>, vector<128x2xf32>
    %1 = vector.extract_strided_slice %0 {offsets = [0, 0], sizes = [128, 1], strides = [1, 1]} : vector<128x2xf32> to vector<128x1xf32>
    %c0_1 = arith.constant 0 : index
    %c0_2 = arith.constant 0 : index
    %2 = vector.load %arg2[%c0_1, %c0_2] : memref<2x128xf32, #tpu.memory_space<vmem>>, vector<1x128xf32>
    %3 = vector.broadcast %1 : vector<128x1xf32> to vector<128x128xf32>
    %4 = vector.broadcast %2 : vector<1x128xf32> to vector<128x128xf32>
    %5 = arith.mulf %3, %4 : vector<128x128xf32>
    %6 = vector.extract_strided_slice %0 {offsets = [0, 1], sizes = [128, 1], strides = [1, 1]} : vector<128x2xf32> to vector<128x1xf32>
    %c1 = arith.constant 1 : index
    %c0_3 = arith.constant 0 : index
    %7 = vector.load %arg2[%c1, %c0_3] : memref<2x128xf32, #tpu.memory_space<vmem>>, vector<1x128xf32>
    %8 = vector.broadcast %6 : vector<128x1xf32> to vector<128x128xf32>
    %9 = vector.broadcast %7 : vector<1x128xf32> to vector<128x128xf32>
    %10 = arith.mulf %8, %9 : vector<128x128xf32>
    %11 = arith.addf %5, %10 : vector<128x128xf32>
    %c0_4 = arith.constant 0 : index
    %c0_5 = arith.constant 0 : index
    %12 = vector.load %arg3[%c0_4, %c0_5] : memref<1x128xf32, #tpu.memory_space<vmem>>, vector<1x128xf32>
    %13 = vector.broadcast %12 : vector<1x128xf32> to vector<128x128xf32>
    %14 = arith.addf %11, %13 : vector<128x128xf32>
    %cst = arith.constant 0.000000e+00 : f32
    %15 = vector.broadcast %cst : f32 to vector<128x128xf32>
    %16 = arith.subf %15, %14 : vector<128x128xf32>
    %17 = math.exp %16 : vector<128x128xf32>
    %cst_6 = arith.constant 1.000000e+00 : f32
    %18 = vector.broadcast %cst_6 : f32 to vector<128x128xf32>
    %19 = arith.addf %18, %17 : vector<128x128xf32>
    %cst_7 = arith.constant 1.000000e+00 : f32
    %20 = vector.broadcast %cst_7 : f32 to vector<128x128xf32>
    %21 = arith.divf %20, %19 : vector<128x128xf32>
    %22 = arith.mulf %14, %21 : vector<128x128xf32>
    %c0_8 = arith.constant 0 : index
    %c0_9 = arith.constant 0 : index
    %c0_10 = arith.constant 0 : index
    %23 = vector.load %arg4[%c0_8, %c0_9, %c0_10] : memref<4x128x128xf32, #tpu.memory_space<vmem>>, vector<1x128x128xf32>
    %24 = vector.shape_cast %23 : vector<1x128x128xf32> to vector<128x128xf32>
    %cst_11 = arith.constant dense<0.000000e+00> : vector<128x128xf32>
    %25 = tpu.matmul %22, %24, %cst_11 {dimension_numbers = #tpu.dot_dimension_numbers<[1], [0], [0], [1], [0, 0, 1, 1], [], []>} : vector<128x128xf32>, vector<128x128xf32>, vector<128x128xf32> -> vector<128x128xf32>
    %c0_12 = arith.constant 0 : index
    %c0_13 = arith.constant 0 : index
    %c0_14 = arith.constant 0 : index
    %26 = vector.load %arg5[%c0_12, %c0_13, %c0_14] : memref<4x1x128xf32, #tpu.memory_space<vmem>>, vector<1x1x128xf32>
    %27 = vector.shape_cast %26 : vector<1x1x128xf32> to vector<1x128xf32>
    %28 = vector.broadcast %27 : vector<1x128xf32> to vector<128x128xf32>
    %29 = arith.addf %25, %28 : vector<128x128xf32>
    %cst_15 = arith.constant 0.000000e+00 : f32
    %30 = vector.broadcast %cst_15 : f32 to vector<128x128xf32>
    %31 = arith.subf %30, %29 : vector<128x128xf32>
    %32 = math.exp %31 : vector<128x128xf32>
    %cst_16 = arith.constant 1.000000e+00 : f32
    %33 = vector.broadcast %cst_16 : f32 to vector<128x128xf32>
    %34 = arith.addf %33, %32 : vector<128x128xf32>
    %cst_17 = arith.constant 1.000000e+00 : f32
    %35 = vector.broadcast %cst_17 : f32 to vector<128x128xf32>
    %36 = arith.divf %35, %34 : vector<128x128xf32>
    %37 = arith.mulf %29, %36 : vector<128x128xf32>
    %c1_18 = arith.constant 1 : index
    %c0_19 = arith.constant 0 : index
    %c0_20 = arith.constant 0 : index
    %38 = vector.load %arg4[%c1_18, %c0_19, %c0_20] : memref<4x128x128xf32, #tpu.memory_space<vmem>>, vector<1x128x128xf32>
    %39 = vector.shape_cast %38 : vector<1x128x128xf32> to vector<128x128xf32>
    %cst_21 = arith.constant dense<0.000000e+00> : vector<128x128xf32>
    %40 = tpu.matmul %37, %39, %cst_21 {dimension_numbers = #tpu.dot_dimension_numbers<[1], [0], [0], [1], [0, 0, 1, 1], [], []>} : vector<128x128xf32>, vector<128x128xf32>, vector<128x128xf32> -> vector<128x128xf32>
    %c1_22 = arith.constant 1 : index
    %c0_23 = arith.constant 0 : index
    %c0_24 = arith.constant 0 : index
    %41 = vector.load %arg5[%c1_22, %c0_23, %c0_24] : memref<4x1x128xf32, #tpu.memory_space<vmem>>, vector<1x1x128xf32>
    %42 = vector.shape_cast %41 : vector<1x1x128xf32> to vector<1x128xf32>
    %43 = vector.broadcast %42 : vector<1x128xf32> to vector<128x128xf32>
    %44 = arith.addf %40, %43 : vector<128x128xf32>
    %cst_25 = arith.constant 0.000000e+00 : f32
    %45 = vector.broadcast %cst_25 : f32 to vector<128x128xf32>
    %46 = arith.subf %45, %44 : vector<128x128xf32>
    %47 = math.exp %46 : vector<128x128xf32>
    %cst_26 = arith.constant 1.000000e+00 : f32
    %48 = vector.broadcast %cst_26 : f32 to vector<128x128xf32>
    %49 = arith.addf %48, %47 : vector<128x128xf32>
    %cst_27 = arith.constant 1.000000e+00 : f32
    %50 = vector.broadcast %cst_27 : f32 to vector<128x128xf32>
    %51 = arith.divf %50, %49 : vector<128x128xf32>
    %52 = arith.mulf %44, %51 : vector<128x128xf32>
    %c2 = arith.constant 2 : index
    %c0_28 = arith.constant 0 : index
    %c0_29 = arith.constant 0 : index
    %53 = vector.load %arg4[%c2, %c0_28, %c0_29] : memref<4x128x128xf32, #tpu.memory_space<vmem>>, vector<1x128x128xf32>
    %54 = vector.shape_cast %53 : vector<1x128x128xf32> to vector<128x128xf32>
    %cst_30 = arith.constant dense<0.000000e+00> : vector<128x128xf32>
    %55 = tpu.matmul %52, %54, %cst_30 {dimension_numbers = #tpu.dot_dimension_numbers<[1], [0], [0], [1], [0, 0, 1, 1], [], []>} : vector<128x128xf32>, vector<128x128xf32>, vector<128x128xf32> -> vector<128x128xf32>
    %c2_31 = arith.constant 2 : index
    %c0_32 = arith.constant 0 : index
    %c0_33 = arith.constant 0 : index
    %56 = vector.load %arg5[%c2_31, %c0_32, %c0_33] : memref<4x1x128xf32, #tpu.memory_space<vmem>>, vector<1x1x128xf32>
    %57 = vector.shape_cast %56 : vector<1x1x128xf32> to vector<1x128xf32>
    %58 = vector.broadcast %57 : vector<1x128xf32> to vector<128x128xf32>
    %59 = arith.addf %55, %58 : vector<128x128xf32>
    %cst_34 = arith.constant 0.000000e+00 : f32
    %60 = vector.broadcast %cst_34 : f32 to vector<128x128xf32>
    %61 = arith.subf %60, %59 : vector<128x128xf32>
    %62 = math.exp %61 : vector<128x128xf32>
    %cst_35 = arith.constant 1.000000e+00 : f32
    %63 = vector.broadcast %cst_35 : f32 to vector<128x128xf32>
    %64 = arith.addf %63, %62 : vector<128x128xf32>
    %cst_36 = arith.constant 1.000000e+00 : f32
    %65 = vector.broadcast %cst_36 : f32 to vector<128x128xf32>
    %66 = arith.divf %65, %64 : vector<128x128xf32>
    %67 = arith.mulf %59, %66 : vector<128x128xf32>
    %c3 = arith.constant 3 : index
    %c0_37 = arith.constant 0 : index
    %c0_38 = arith.constant 0 : index
    %68 = vector.load %arg4[%c3, %c0_37, %c0_38] : memref<4x128x128xf32, #tpu.memory_space<vmem>>, vector<1x128x128xf32>
    %69 = vector.shape_cast %68 : vector<1x128x128xf32> to vector<128x128xf32>
    %cst_39 = arith.constant dense<0.000000e+00> : vector<128x128xf32>
    %70 = tpu.matmul %67, %69, %cst_39 {dimension_numbers = #tpu.dot_dimension_numbers<[1], [0], [0], [1], [0, 0, 1, 1], [], []>} : vector<128x128xf32>, vector<128x128xf32>, vector<128x128xf32> -> vector<128x128xf32>
    %c3_40 = arith.constant 3 : index
    %c0_41 = arith.constant 0 : index
    %c0_42 = arith.constant 0 : index
    %71 = vector.load %arg5[%c3_40, %c0_41, %c0_42] : memref<4x1x128xf32, #tpu.memory_space<vmem>>, vector<1x1x128xf32>
    %72 = vector.shape_cast %71 : vector<1x1x128xf32> to vector<1x128xf32>
    %73 = vector.broadcast %72 : vector<1x128xf32> to vector<128x128xf32>
    %74 = arith.addf %70, %73 : vector<128x128xf32>
    %cst_43 = arith.constant 0.000000e+00 : f32
    %75 = vector.broadcast %cst_43 : f32 to vector<128x128xf32>
    %76 = arith.subf %75, %74 : vector<128x128xf32>
    %77 = math.exp %76 : vector<128x128xf32>
    %cst_44 = arith.constant 1.000000e+00 : f32
    %78 = vector.broadcast %cst_44 : f32 to vector<128x128xf32>
    %79 = arith.addf %78, %77 : vector<128x128xf32>
    %cst_45 = arith.constant 1.000000e+00 : f32
    %80 = vector.broadcast %cst_45 : f32 to vector<128x128xf32>
    %81 = arith.divf %80, %79 : vector<128x128xf32>
    %82 = arith.mulf %74, %81 : vector<128x128xf32>
    %c0_46 = arith.constant 0 : index
    %c0_47 = arith.constant 0 : index
    %83 = vector.load %arg6[%c0_46, %c0_47] : memref<128x128xf32, #tpu.memory_space<vmem>>, vector<128x128xf32>
    %cst_48 = arith.constant dense<0.000000e+00> : vector<128x128xf32>
    %84 = tpu.matmul %82, %83, %cst_48 {dimension_numbers = #tpu.dot_dimension_numbers<[1], [0], [0], [1], [0, 0, 1, 1], [], []>} : vector<128x128xf32>, vector<128x128xf32>, vector<128x128xf32> -> vector<128x128xf32>
    %85 = vector.extract_strided_slice %84 {offsets = [0, 0], sizes = [128, 8], strides = [1, 1]} : vector<128x128xf32> to vector<128x8xf32>
    %c0_49 = arith.constant 0 : index
    %c0_50 = arith.constant 0 : index
    %86 = vector.load %arg7[%c0_49, %c0_50] : memref<1x8xf32, #tpu.memory_space<vmem>>, vector<1x8xf32>
    %87 = vector.broadcast %86 : vector<1x8xf32> to vector<128x8xf32>
    %88 = arith.addf %85, %87 : vector<128x8xf32>
    %c0_51 = arith.constant 0 : index
    %c0_52 = arith.constant 0 : index
    %89 = vector.load %arg8[%c0_51, %c0_52] : memref<128x8xf32, #tpu.memory_space<vmem>>, vector<128x8xf32>
    tpu.vector_store %arg8[%c0_51, %c0_52], %88 {strides = array<i32>} : memref<128x8xf32, #tpu.memory_space<vmem>>, vector<128x8xf32>,
    return
  }
  func.func @transform_0(%arg0: i32) -> (i32, i32) {
    %c0_i32 = arith.constant 0 : i32
    %c0_i32_0 = arith.constant 0 : i32
    return %arg0, %c0_i32 : i32, i32
  }
  func.func @transform_1(%arg0: i32) -> (i32, i32) {
    %c0_i32 = arith.constant 0 : i32
    %c0_i32_0 = arith.constant 0 : i32
    %c0_i32_1 = arith.constant 0 : i32
    return %c0_i32, %c0_i32_0 : i32, i32
  }
  func.func @transform_2(%arg0: i32) -> (i32, i32) {
    %c0_i32 = arith.constant 0 : i32
    %c0_i32_0 = arith.constant 0 : i32
    %c0_i32_1 = arith.constant 0 : i32
    return %c0_i32, %c0_i32_0 : i32, i32
  }
  func.func @transform_3(%arg0: i32) -> (i32, i32, i32) {
    %c0_i32 = arith.constant 0 : i32
    %c0_i32_0 = arith.constant 0 : i32
    %c0_i32_1 = arith.constant 0 : i32
    %c0_i32_2 = arith.constant 0 : i32
    return %c0_i32, %c0_i32_0, %c0_i32_1 : i32, i32, i32
  }
  func.func @transform_4(%arg0: i32) -> (i32, i32, i32) {
    %c0_i32 = arith.constant 0 : i32
    %c0_i32_0 = arith.constant 0 : i32
    %c0_i32_1 = arith.constant 0 : i32
    %c0_i32_2 = arith.constant 0 : i32
    return %c0_i32, %c0_i32_0, %c0_i32_1 : i32, i32, i32
  }
  func.func @transform_5(%arg0: i32) -> (i32, i32) {
    %c0_i32 = arith.constant 0 : i32
    %c0_i32_0 = arith.constant 0 : i32
    %c0_i32_1 = arith.constant 0 : i32
    return %c0_i32, %c0_i32_0 : i32, i32
  }
  func.func @transform_6(%arg0: i32) -> (i32, i32) {
    %c0_i32 = arith.constant 0 : i32
    %c0_i32_0 = arith.constant 0 : i32
    %c0_i32_1 = arith.constant 0 : i32
    return %c0_i32, %c0_i32_0 : i32, i32
  }
  func.func @transform_7(%arg0: i32) -> (i32, i32) {
    %c0_i32 = arith.constant 0 : i32
    %c0_i32_0 = arith.constant 0 : i32
    return %arg0, %c0_i32 : i32, i32
  }
}

</mosaic_0001>

<llo_original>
// kernel: pinn_forward.1
$region0: #{pinn_forward.1}
  #allocation0 [shape = 'u32[]', space=smem, size = 0x4, offset = 0x4, fixed_abs, tag = 'smem constant byte address 0x4 - core index']
  #allocation1 [shape = 'u32[144,128]{1,0:T(1,128)}', space=vmem, size = 0x12000, scoped, tag = 'internal scratch']
  %s0 = inlined_call_operand.vmem [shape: f32[384,2], index: 0, kind: input, shape index: {}]
  %s1 = inlined_call_operand.vmem [shape: f32[2,128], index: 1, kind: input, shape index: {}]
  %s2 = inlined_call_operand.vmem [shape: f32[1,128], index: 2, kind: input, shape index: {}]
  %s3 = inlined_call_operand.vmem [shape: f32[4,128,128], index: 3, kind: input, shape index: {}]
  %s4 = inlined_call_operand.vmem [shape: f32[4,1,128], index: 4, kind: input, shape index: {}]
  %s5 = inlined_call_operand.vmem [shape: f32[128,128], index: 5, kind: input, shape index: {}]
  %s6 = inlined_call_operand.vmem [shape: f32[1,8], index: 6, kind: input, shape index: {}]
  %s7 = inlined_call_operand.vmem [shape: f32[384,8], index: 7, kind: output, shape index: {}]
  %s8 = sld [smem:[#allocation0]]
  $region61: #{pinn_forward.1} parent=0
    _
  %s10 = ssub.s32 1, %s8
  %s11 = scalar_select 0, %s10, %s8
  loop: start=0, step=1, limit=5
  $region2: #{pinn_forward.1} parent=0 // loop_pre_header
    _
  $region3: #{pinn_forward.1} parent=0 // loop_header
    %s13 = sphi 0, %s17
    %p14 = scmp.ge.s32.totalorder %s13, 5
    %s23 = sphi 0, %s25
    %s26 = sphi 0, %s23
    %s27 = sphi 0, %s26
    %s43 = sphi 0, %s27
    %s47 = sphi 0, %s47
    %s49 = sphi 0, %s47
    %s50 = sphi 0, %s49
    %s64 = sphi 0, %s50
    %s68 = sphi 0, %s68
    %s70 = sphi 0, %s68
    %s71 = sphi 0, %s70
    %s85 = sphi 0, %s71
    %s89 = sphi 0, %s89
    %s91 = sphi 0, %s89
    %s92 = sphi 0, %s91
    %s106 = sphi 0, %s92
    %s110 = sphi 0, %s110
    %s112 = sphi 0, %s110
    %s113 = sphi 0, %s112
    %s127 = sphi 0, %s113
    %s131 = sphi 0, %s131
    %s133 = sphi 0, %s131
    %s134 = sphi 0, %s133
    %s148 = sphi 0, %s134
    %s152 = sphi 0, %s152
    %s154 = sphi 0, %s152
    %s155 = sphi 0, %s154
    %s169 = sphi 0, %s155
    %s175 = sphi 0, %s177
    %s178 = sphi 0, %s175
    %s179 = sphi 0, %s178
    %s195 = sphi 0, %s179
  $region4: #{pinn_forward.1} parent=0 // loop_header_branch
    %16 = sbr.rel (%p14) target = $region8
  $region5: #{pinn_forward.1} parent=0 // loop_body
    %s18 = ssub.s32 %s13, 1
    %s19 = ssub.s32 %s13, 2
    %s20 = sadd.s32 %s13, 1
    %s21 = ssub.s32 %s13, %s20
    %p22 = scmp.eq.s32.totalorder %s21, 0
    %s24 = sadd.s32 %s23, 1
    %s25 = scalar_select %p22, %s23, %s24
    %p28 = pneg %p22
    %p29 = scmp.eq.s32.totalorder %s13, 2
    %p30 = por %p28, %p29
    %p31 = scmp.ne.s32.totalorder %s23, %s26
    %p32 = scmp.eq.s32.totalorder %s13, 0
    %p33 = por %p31, %p32
    %p34 = scmp.ne.s32.totalorder %s23, %s26
    %p35 = scmp.eq.s32.totalorder %s18, 2
    %p36 = por %p34, %p35
    %p37 = scmp.ne.s32.totalorder %s26, %s27
    %p38 = scmp.eq.s32.totalorder %s18, 0
    %p39 = por %p37, %p38
    %p40 = scmp.ne.s32.totalorder %s26, %s27
    %p41 = scmp.eq.s32.totalorder %s19, 2
    %p42 = por %p40, %p41
    %p44 = scmp.ne.s32.totalorder %s27, %s43
    %p45 = scmp.eq.s32.totalorder %s19, 0
    %p46 = por %p44, %p45
    %s48 = sadd.s32 %s47, 1
    %p51 = scmp.eq.s32.totalorder %s13, 2
    %p52 = scmp.ne.s32.totalorder %s47, %s49
    %p53 = scmp.eq.s32.totalorder %s13, 0
    %p54 = por %p52, %p53
    %p55 = scmp.ne.s32.totalorder %s47, %s49
    %p56 = scmp.eq.s32.totalorder %s18, 2
    %p57 = por %p55, %p56
    %p58 = scmp.ne.s32.totalorder %s49, %s50
    %p59 = scmp.eq.s32.totalorder %s18, 0
    %p60 = por %p58, %p59
    %p61 = scmp.ne.s32.totalorder %s49, %s50
    %p62 = scmp.eq.s32.totalorder %s19, 2
    %p63 = por %p61, %p62
    %p65 = scmp.ne.s32.totalorder %s50, %s64
    %p66 = scmp.eq.s32.totalorder %s19, 0
    %p67 = por %p65, %p66
    %s69 = sadd.s32 %s68, 1
    %p72 = scmp.eq.s32.totalorder %s13, 2
    %p73 = scmp.ne.s32.totalorder %s68, %s70
    %p74 = scmp.eq.s32.totalorder %s13, 0
    %p75 = por %p73, %p74
    %p76 = scmp.ne.s32.totalorder %s68, %s70
    %p77 = scmp.eq.s32.totalorder %s18, 2
    %p78 = por %p76, %p77
    %p79 = scmp.ne.s32.totalorder %s70, %s71
    %p80 = scmp.eq.s32.totalorder %s18, 0
    %p81 = por %p79, %p80
    %p82 = scmp.ne.s32.totalorder %s70, %s71
    %p83 = scmp.eq.s32.totalorder %s19, 2
    %p84 = por %p82, %p83
    %p86 = scmp.ne.s32.totalorder %s71, %s85
    %p87 = scmp.eq.s32.totalorder %s19, 0
    %p88 = por %p86, %p87
    %s90 = sadd.s32 %s89, 1
    %p93 = scmp.eq.s32.totalorder %s13, 2
    %p94 = scmp.ne.s32.totalorder %s89, %s91
    %p95 = scmp.eq.s32.totalorder %s13, 0
    %p96 = por %p94, %p95
    %p97 = scmp.ne.s32.totalorder %s89, %s91
    %p98 = scmp.eq.s32.totalorder %s18, 2
    %p99 = por %p97, %p98
    %p100 = scmp.ne.s32.totalorder %s91, %s92
    %p101 = scmp.eq.s32.totalorder %s18, 0
    %p102 = por %p100, %p101
    %p103 = scmp.ne.s32.totalorder %s91, %s92
    %p104 = scmp.eq.s32.totalorder %s19, 2
    %p105 = por %p103, %p104
    %p107 = scmp.ne.s32.totalorder %s92, %s106
    %p108 = scmp.eq.s32.totalorder %s19, 0
    %p109 = por %p107, %p108
    %s111 = sadd.s32 %s110, 1
    %p114 = scmp.eq.s32.totalorder %s13, 2
    %p115 = scmp.ne.s32.totalorder %s110, %s112
    %p116 = scmp.eq.s32.totalorder %s13, 0
    %p117 = por %p115, %p116
    %p118 = scmp.ne.s32.totalorder %s110, %s112
    %p119 = scmp.eq.s32.totalorder %s18, 2
    %p120 = por %p118, %p119
    %p121 = scmp.ne.s32.totalorder %s112, %s113
    %p122 = scmp.eq.s32.totalorder %s18, 0
    %p123 = por %p121, %p122
    %p124 = scmp.ne.s32.totalorder %s112, %s113
    %p125 = scmp.eq.s32.totalorder %s19, 2
    %p126 = por %p124, %p125
    %p128 = scmp.ne.s32.totalorder %s113, %s127
    %p129 = scmp.eq.s32.totalorder %s19, 0
    %p130 = por %p128, %p129
    %s132 = sadd.s32 %s131, 1
    %p135 = scmp.eq.s32.totalorder %s13, 2
    %p136 = scmp.ne.s32.totalorder %s131, %s133
    %p137 = scmp.eq.s32.totalorder %s13, 0
    %p138 = por %p136, %p137
    %p139 = scmp.ne.s32.totalorder %s131, %s133
    %p140 = scmp.eq.s32.totalorder %s18, 2
    %p141 = por %p139, %p140
    %p142 = scmp.ne.s32.totalorder %s133, %s134
    %p143 = scmp.eq.s32.totalorder %s18, 0
    %p144 = por %p142, %p143
    %p145 = scmp.ne.s32.totalorder %s133, %s134
    %p146 = scmp.eq.s32.totalorder %s19, 2
    %p147 = por %p145, %p146
    %p149 = scmp.ne.s32.totalorder %s134, %s148
    %p150 = scmp.eq.s32.totalorder %s19, 0
    %p151 = por %p149, %p150
    %s153 = sadd.s32 %s152, 1
    %p156 = scmp.eq.s32.totalorder %s13, 2
    %p157 = scmp.ne.s32.totalorder %s152, %s154
    %p158 = scmp.eq.s32.totalorder %s13, 0
    %p159 = por %p157, %p158
    %p160 = scmp.ne.s32.totalorder %s152, %s154
    %p161 = scmp.eq.s32.totalorder %s18, 2
    %p162 = por %p160, %p161
    %p163 = scmp.ne.s32.totalorder %s154, %s155
    %p164 = scmp.eq.s32.totalorder %s18, 0
    %p165 = por %p163, %p164
    %p166 = scmp.ne.s32.totalorder %s154, %s155
    %p167 = scmp.eq.s32.totalorder %s19, 2
    %p168 = por %p166, %p167
    %p170 = scmp.ne.s32.totalorder %s155, %s169
    %p171 = scmp.eq.s32.totalorder %s19, 0
    %p172 = por %p170, %p171
    %s173 = ssub.s32 %s13, %s20
    %p174 = scmp.eq.s32.totalorder %s173, 0
    %s176 = sadd.s32 %s175, 1
    %s177 = scalar_select %p174, %s175, %s176
    %p180 = pneg %p174
    %p181 = scmp.eq.s32.totalorder %s13, 2
    %p182 = por %p180, %p181
    %p183 = scmp.ne.s32.totalorder %s175, %s178
    %p184 = scmp.eq.s32.totalorder %s13, 0
    %p185 = por %p183, %p184
    %p186 = scmp.ne.s32.totalorder %s175, %s178
    %p187 = scmp.eq.s32.totalorder %s18, 2
    %p188 = por %p186, %p187
    %p189 = scmp.ne.s32.totalorder %s178, %s179
    %p190 = scmp.eq.s32.totalorder %s18, 0
    %p191 = por %p189, %p190
    %p192 = scmp.ne.s32.totalorder %s178, %s179
    %p193 = scmp.eq.s32.totalorder %s19, 2
    %p194 = por %p192, %p193
    %p196 = scmp.ne.s32.totalorder %s179, %s195
    %p197 = scmp.eq.s32.totalorder %s19, 0
    %p198 = por %p196, %p197
    %p199 = scmp.le.s32.totalorder 1, %s13
    %p200 = scmp.lt.s32.totalorder %s13, 4
    %p201 = pnand %p199, %p200
    %p202 = pneg %p201
    // Predicated region
    $region9: #{pinn_forward.1} parent=5 // pred_check
      _
    $region10: #{pinn_forward.1} parent=5 // pred_check_branch
      %204 = sbr.rel (%p201) target = $region12
    $region11: #{pinn_forward.1} parent=5 // pred_region
      %s205 = ssub.s32 %s13, 1
      // Predicated region
      $region13: #{pinn_forward.1} parent=11 // pred_check
        %p206 = pneg %p60
      $region14: #{pinn_forward.1} parent=11 // pred_check_branch
        %208 = sbr.rel (%p206) target = $region16
      $region15: #{pinn_forward.1} parent=11 // pred_region
        _
      $region16: #{pinn_forward.1} parent=11 // pred_fallthru
        _
      // Predicated region
      $region17: #{pinn_forward.1} parent=11 // pred_check
        %p209 = pneg %p81
      $region18: #{pinn_forward.1} parent=11 // pred_check_branch
        %211 = sbr.rel (%p209) target = $region20
      $region19: #{pinn_forward.1} parent=11 // pred_region
        _
      $region20: #{pinn_forward.1} parent=11 // pred_fallthru
        _
      // Predicated region
      $region21: #{pinn_forward.1} parent=11 // pred_check
        %p212 = pneg %p102
      $region22: #{pinn_forward.1} parent=11 // pred_check_branch
        %214 = sbr.rel (%p212) target = $region24
      $region23: #{pinn_forward.1} parent=11 // pred_region
        _
      $region24: #{pinn_forward.1} parent=11 // pred_fallthru
        _
      // Predicated region
      $region25: #{pinn_forward.1} parent=11 // pred_check
        %p215 = pneg %p123
      $region26: #{pinn_forward.1} parent=11 // pred_check_branch
        %217 = sbr.rel (%p215) target = $region28
      $region27: #{pinn_forward.1} parent=11 // pred_region
        _
      $region28: #{pinn_forward.1} parent=11 // pred_fallthru
        _
      // Predicated region
      $region29: #{pinn_forward.1} parent=11 // pred_check
        %p218 = pneg %p144
      $region30: #{pinn_forward.1} parent=11 // pred_check_branch
        %220 = sbr.rel (%p218) target = $region32
      $region31: #{pinn_forward.1} parent=11 // pred_region
        _
      $region32: #{pinn_forward.1} parent=11 // pred_fallthru
        _
      // Predicated region
      $region33: #{pinn_forward.1} parent=11 // pred_check
        %p221 = pneg %p165
      $region34: #{pinn_forward.1} parent=11 // pred_check_branch
        %223 = sbr.rel (%p221) target = $region36
      $region35: #{pinn_forward.1} parent=11 // pred_region
        _
      $region36: #{pinn_forward.1} parent=11 // pred_fallthru
        _
    $region12: #{pinn_forward.1} parent=5 // pred_fallthru
      _
    %p224 = scmp.lt.s32.totalorder %s13, 3
    // Predicated region
    $region37: #{pinn_forward.1} parent=5 // pred_check
      %p225 = pneg %p224
    $region38: #{pinn_forward.1} parent=5 // pred_check_branch
      %227 = sbr.rel (%p225) target = $region40
    $region39: #{pinn_forward.1} parent=5 // pred_region
      // Predicated region
      $region41: #{pinn_forward.1} parent=39 // pred_check
        %p228 = pneg %p33
      $region42: #{pinn_forward.1} parent=39 // pred_check_branch
        %230 = sbr.rel (%p228) target = $region44
      $region43: #{pinn_forward.1} parent=39 // pred_region
        %s231 = smul.u32 16, %s13
        %p232 = scmp.lt.s32.totalorder %s231, 47
        %s233 = scalar_select %p232, %s231, 47
        %s234 = smul.addr %s233, 8
        %s235 = scalar_lea.vmem %s0, %s234
        %s236 = smul.u32 16, %s13
      $region44: #{pinn_forward.1} parent=39 // pred_fallthru
        _
    $region40: #{pinn_forward.1} parent=5 // pred_fallthru
      _
    %p237 = scmp.le.s32.totalorder 1, %s13
    %p238 = scmp.lt.s32.totalorder %s13, 4
    %p239 = pnand %p237, %p238
    %p240 = pneg %p239
    // Predicated region
    $region45: #{pinn_forward.1} parent=5 // pred_check
      _
    $region46: #{pinn_forward.1} parent=5 // pred_check_branch
      %242 = sbr.rel (%p239) target = $region48
    $region47: #{pinn_forward.1} parent=5 // pred_region
      %s243 = ssub.s32 %s13, 1
      %s244 = smul.u32 16, %s18
      %p245 = scmp.lt.s32.totalorder %s244, 47
      %s246 = scalar_select %p245, %s244, 47
      %s247 = smul.addr %s246, 8
      %s248 = scalar_lea.vmem %s0, %s247
      %p249 = pneg %p39
      %p250 = pneg %p36
      %p251 = pneg %p60
      %p252 = pneg %p57
      %p253 = pneg %p81
      %p254 = pneg %p78
      %p255 = pneg %p102
      %p256 = pneg %p99
      %p257 = pneg %p123
      %p258 = pneg %p120
      %p259 = pneg %p144
      %p260 = pneg %p141
      %p261 = pneg %p165
      %p262 = pneg %p162
      %p263 = pneg %p191
      %p264 = pneg %p188
      %s265 = smul.u32 16, %s18
      %p266 = scmp.lt.s32.totalorder %s265, 47
      %s267 = scalar_select %p266, %s265, 47
      %s268 = smul.addr %s267, 8
      %s269 = scalar_lea.vmem %s7, %s268
      %s270 = smul.u32 16, %s18
      %p271 = scmp.lt.s32.totalorder %s270, 47
      %s272 = scalar_select %p271, %s270, 47
      %s273 = smul.addr %s272, 8
      %s274 = scalar_lea.vmem %s0, %s273
      %s275 = smul.u32 16, %s18
      %s276 = smul.u32 16, %s18
      %p277 = scmp.lt.s32.totalorder %s276, 47
      %s278 = scalar_select %p277, %s276, 47
      %s279 = smul.addr %s278, 8
      %s280 = scalar_lea.vmem %s7, %s279
      %s281 = smul.u32 16, %s18
      %v282 = vld [vmem:[%s274] sm:$0xff]
      %v283 = vld [vmem:[%s274 + $0x8] sm:$0xff]
      %v284 = vld [vmem:[%s274 + $0x10] sm:$0xff]
      %v285 = vld [vmem:[%s274 + $0x18] sm:$0xff]
      %v286 = vld [vmem:[%s274 + $0x20] sm:$0xff]
      %v287 = vld [vmem:[%s274 + $0x28] sm:$0xff]
      %v288 = vld [vmem:[%s274 + $0x30] sm:$0xff]
      %v289 = vld [vmem:[%s274 + $0x38] sm:$0xff]
      %v290 = vld [vmem:[%s274 + $0x40] sm:$0xff]
      %v291 = vld [vmem:[%s274 + $0x48] sm:$0xff]
      %v292 = vld [vmem:[%s274 + $0x50] sm:$0xff]
      %v293 = vld [vmem:[%s274 + $0x58] sm:$0xff]
      %v294 = vld [vmem:[%s274 + $0x60] sm:$0xff]
      %v295 = vld [vmem:[%s274 + $0x68] sm:$0xff]
      %v296 = vld [vmem:[%s274 + $0x70] sm:$0xff]
      %v297 = vld [vmem:[%s274 + $0x78] sm:$0xff]
      %v298 = vld [vmem:[%s1] sm:$0x1]
      %300 = vset.pattern.permute.xlu0 0
      %301 = vperm.xlu0 %300, %v282
      %v302 = vpop.permute.xlu0 %301
      %305 = vset.pattern.permute.xlu0 0
      %306 = vperm.xlu0 %305, %v283
      %v307 = vpop.permute.xlu0 %306
      %310 = vset.pattern.permute.xlu0 0
      %311 = vperm.xlu0 %310, %v284
      %v312 = vpop.permute.xlu0 %311
      %315 = vset.pattern.permute.xlu0 0
      %316 = vperm.xlu0 %315, %v285
      %v317 = vpop.permute.xlu0 %316
      %320 = vset.pattern.permute.xlu0 0
      %321 = vperm.xlu0 %320, %v286
      %v322 = vpop.permute.xlu0 %321
      %325 = vset.pattern.permute.xlu0 0
      %326 = vperm.xlu0 %325, %v287
      %v327 = vpop.permute.xlu0 %326
      %330 = vset.pattern.permute.xlu0 0
      %331 = vperm.xlu0 %330, %v288
      %v332 = vpop.permute.xlu0 %331
      %335 = vset.pattern.permute.xlu0 0
      %336 = vperm.xlu0 %335, %v289
      %v337 = vpop.permute.xlu0 %336
      %340 = vset.pattern.permute.xlu0 0
      %341 = vperm.xlu0 %340, %v290
      %v342 = vpop.permute.xlu0 %341
      %345 = vset.pattern.permute.xlu0 0
      %346 = vperm.xlu0 %345, %v291
      %v347 = vpop.permute.xlu0 %346
      %350 = vset.pattern.permute.xlu0 0
      %351 = vperm.xlu0 %350, %v292
      %v352 = vpop.permute.xlu0 %351
      %355 = vset.pattern.permute.xlu0 0
      %356 = vperm.xlu0 %355, %v293
      %v357 = vpop.permute.xlu0 %356
      %360 = vset.pattern.permute.xlu0 0
      %361 = vperm.xlu0 %360, %v294
      %v362 = vpop.permute.xlu0 %361
      %365 = vset.pattern.permute.xlu0 0
      %366 = vperm.xlu0 %365, %v295
      %v367 = vpop.permute.xlu0 %366
      %370 = vset.pattern.permute.xlu0 0
      %371 = vperm.xlu0 %370, %v296
      %v372 = vpop.permute.xlu0 %371
      %375 = vset.pattern.permute.xlu0 0
      %376 = vperm.xlu0 %375, %v297
      %v377 = vpop.permute.xlu0 %376
      %v379 = vlaneseq
      %v380 = vshrl.u32 %v379, 7
      %v381 = vsub.s32 0, %v380
      %v382 = vrot.slane %v298, %v381
      %v383 = vmul.f32 %v302, %v382
      %v384 = vmul.f32 %v307, %v382
      %v385 = vmul.f32 %v312, %v382
      %v386 = vmul.f32 %v317, %v382
      %v387 = vmul.f32 %v322, %v382
      %v388 = vmul.f32 %v327, %v382
      %v389 = vmul.f32 %v332, %v382
      %v390 = vmul.f32 %v337, %v382
      %v391 = vmul.f32 %v342, %v382
      %v392 = vmul.f32 %v347, %v382
      %v393 = vmul.f32 %v352, %v382
      %v394 = vmul.f32 %v357, %v382
      %v395 = vmul.f32 %v362, %v382
      %v396 = vmul.f32 %v367, %v382
      %v397 = vmul.f32 %v372, %v382
      %v398 = vmul.f32 %v377, %v382
      %v399 = vld [vmem:[%s1 + $0x1] sm:$0x1]
      %400 = vset.pattern.permute.xlu0 1
      %401 = vperm.xlu0 %400, %v282
      %v402 = vpop.permute.xlu0 %401
      %404 = vset.pattern.permute.xlu0 1
      %405 = vperm.xlu0 %404, %v283
      %v406 = vpop.permute.xlu0 %405
      %408 = vset.pattern.permute.xlu0 1
      %409 = vperm.xlu0 %408, %v284
      %v410 = vpop.permute.xlu0 %409
      %412 = vset.pattern.permute.xlu0 1
      %413 = vperm.xlu0 %412, %v285
      %v414 = vpop.permute.xlu0 %413
      %416 = vset.pattern.permute.xlu0 1
      %417 = vperm.xlu0 %416, %v286
      %v418 = vpop.permute.xlu0 %417
      %420 = vset.pattern.permute.xlu0 1
      %421 = vperm.xlu0 %420, %v287
      %v422 = vpop.permute.xlu0 %421
      %424 = vset.pattern.permute.xlu0 1
      %425 = vperm.xlu0 %424, %v288
      %v426 = vpop.permute.xlu0 %425
      %428 = vset.pattern.permute.xlu0 1
      %429 = vperm.xlu0 %428, %v289
      %v430 = vpop.permute.xlu0 %429
      %432 = vset.pattern.permute.xlu0 1
      %433 = vperm.xlu0 %432, %v290
      %v434 = vpop.permute.xlu0 %433
      %436 = vset.pattern.permute.xlu0 1
      %437 = vperm.xlu0 %436, %v291
      %v438 = vpop.permute.xlu0 %437
      %440 = vset.pattern.permute.xlu0 1
      %441 = vperm.xlu0 %440, %v292
      %v442 = vpop.permute.xlu0 %441
      %444 = vset.pattern.permute.xlu0 1
      %445 = vperm.xlu0 %444, %v293
      %v446 = vpop.permute.xlu0 %445
      %448 = vset.pattern.permute.xlu0 1
      %449 = vperm.xlu0 %448, %v294
      %v450 = vpop.permute.xlu0 %449
      %452 = vset.pattern.permute.xlu0 1
      %453 = vperm.xlu0 %452, %v295
      %v454 = vpop.permute.xlu0 %453
      %456 = vset.pattern.permute.xlu0 1
      %457 = vperm.xlu0 %456, %v296
      %v458 = vpop.permute.xlu0 %457
      %460 = vset.pattern.permute.xlu0 1
      %461 = vperm.xlu0 %460, %v297
      %v462 = vpop.permute.xlu0 %461
      %v464 = vlaneseq
      %v465 = vshrl.u32 %v464, 7
      %v466 = vsub.s32 0, %v465
      %v467 = vrot.slane %v399, %v466
      %v468 = vmul.f32 %v402, %v467
      %v469 = vmul.f32 %v406, %v467
      %v470 = vmul.f32 %v410, %v467
      %v471 = vmul.f32 %v414, %v467
      %v472 = vmul.f32 %v418, %v467
      %v473 = vmul.f32 %v422, %v467
      %v474 = vmul.f32 %v426, %v467
      %v475 = vmul.f32 %v430, %v467
      %v476 = vmul.f32 %v434, %v467
      %v477 = vmul.f32 %v438, %v467
      %v478 = vmul.f32 %v442, %v467
      %v479 = vmul.f32 %v446, %v467
      %v480 = vmul.f32 %v450, %v467
      %v481 = vmul.f32 %v454, %v467
      %v482 = vmul.f32 %v458, %v467
      %v483 = vmul.f32 %v462, %v467
      %v484 = vadd.f32 %v383, %v468
      %v485 = vadd.f32 %v384, %v469
      %v486 = vadd.f32 %v385, %v470
      %v487 = vadd.f32 %v386, %v471
      %v488 = vadd.f32 %v387, %v472
      %v489 = vadd.f32 %v388, %v473
      %v490 = vadd.f32 %v389, %v474
      %v491 = vadd.f32 %v390, %v475
      %v492 = vadd.f32 %v391, %v476
      %v493 = vadd.f32 %v392, %v477
      %v494 = vadd.f32 %v393, %v478
      %v495 = vadd.f32 %v394, %v479
      %v496 = vadd.f32 %v395, %v480
      %v497 = vadd.f32 %v396, %v481
      %v498 = vadd.f32 %v397, %v482
      %v499 = vadd.f32 %v398, %v483
      %v500 = vld [vmem:[%s2] sm:$0x1]
      %v502 = vlaneseq
      %v503 = vshrl.u32 %v502, 7
      %v504 = vsub.s32 0, %v503
      %v505 = vrot.slane %v500, %v504
      %v507 = vadd.f32 %v484, %v505
      %v508 = vadd.f32 %v485, %v505
      %v509 = vadd.f32 %v486, %v505
      %v510 = vadd.f32 %v487, %v505
      %v511 = vadd.f32 %v488, %v505
      %v512 = vadd.f32 %v489, %v505
      %v513 = vadd.f32 %v490, %v505
      %v514 = vadd.f32 %v491, %v505
      %v515 = vadd.f32 %v492, %v505
      %v516 = vadd.f32 %v493, %v505
      %v517 = vadd.f32 %v494, %v505
      %v518 = vadd.f32 %v495, %v505
      %v519 = vadd.f32 %v496, %v505
      %v520 = vadd.f32 %v497, %v505
      %v521 = vadd.f32 %v498, %v505
      %v522 = vadd.f32 %v499, %v505
      %v523 = vsub.f32 0.0, %v507
      %v524 = vsub.f32 0.0, %v508
      %v525 = vsub.f32 0.0, %v509
      %v526 = vsub.f32 0.0, %v510
      %v527 = vsub.f32 0.0, %v511
      %v528 = vsub.f32 0.0, %v512
      %v529 = vsub.f32 0.0, %v513
      %v530 = vsub.f32 0.0, %v514
      %v531 = vsub.f32 0.0, %v515
      %v532 = vsub.f32 0.0, %v516
      %v533 = vsub.f32 0.0, %v517
      %v534 = vsub.f32 0.0, %v518
      %v535 = vsub.f32 0.0, %v519
      %v536 = vsub.f32 0.0, %v520
      %v537 = vsub.f32 0.0, %v521
      %v538 = vsub.f32 0.0, %v522
      %v539 = vmul.f32 %v523, 1.442695
      %v540 = vpow.pop %v539
      %v541 = vmul.f32 %v524, 1.442695
      %v542 = vpow.pop %v541
      %v543 = vmul.f32 %v525, 1.442695
      %v544 = vpow.pop %v543
      %v545 = vmul.f32 %v526, 1.442695
      %v546 = vpow.pop %v545
      %v547 = vmul.f32 %v527, 1.442695
      %v548 = vpow.pop %v547
      %v549 = vmul.f32 %v528, 1.442695
      %v550 = vpow.pop %v549
      %v551 = vmul.f32 %v529, 1.442695
      %v552 = vpow.pop %v551
      %v553 = vmul.f32 %v530, 1.442695
      %v554 = vpow.pop %v553
      %v555 = vmul.f32 %v531, 1.442695
      %v556 = vpow.pop %v555
      %v557 = vmul.f32 %v532, 1.442695
      %v558 = vpow.pop %v557
      %v559 = vmul.f32 %v533, 1.442695
      %v560 = vpow.pop %v559
      %v561 = vmul.f32 %v534, 1.442695
      %v562 = vpow.pop %v561
      %v563 = vmul.f32 %v535, 1.442695
      %v564 = vpow.pop %v563
      %v565 = vmul.f32 %v536, 1.442695
      %v566 = vpow.pop %v565
      %v567 = vmul.f32 %v537, 1.442695
      %v568 = vpow.pop %v567
      %v569 = vmul.f32 %v538, 1.442695
      %v570 = vpow.pop %v569
      %v571 = vadd.f32 %v540, 1.0
      %v572 = vadd.f32 %v542, 1.0
      %v573 = vadd.f32 %v544, 1.0
      %v574 = vadd.f32 %v546, 1.0
      %v575 = vadd.f32 %v548, 1.0
      %v576 = vadd.f32 %v550, 1.0
      %v577 = vadd.f32 %v552, 1.0
      %v578 = vadd.f32 %v554, 1.0
      %v579 = vadd.f32 %v556, 1.0
      %v580 = vadd.f32 %v558, 1.0
      %v581 = vadd.f32 %v560, 1.0
      %v582 = vadd.f32 %v562, 1.0
      %v583 = vadd.f32 %v564, 1.0
      %v584 = vadd.f32 %v566, 1.0
      %v585 = vadd.f32 %v568, 1.0
      %v586 = vadd.f32 %v570, 1.0
      %v587 = vrcp.pop %v571
      %v588 = vmul.f32 1.0, %v587
      %v589 = vrcp.pop %v572
      %v590 = vmul.f32 1.0, %v589
      %v591 = vrcp.pop %v573
      %v592 = vmul.f32 1.0, %v591
      %v593 = vrcp.pop %v574
      %v594 = vmul.f32 1.0, %v593
      %v595 = vrcp.pop %v575
      %v596 = vmul.f32 1.0, %v595
      %v597 = vrcp.pop %v576
      %v598 = vmul.f32 1.0, %v597
      %v599 = vrcp.pop %v577
      %v600 = vmul.f32 1.0, %v599
      %v601 = vrcp.pop %v578
      %v602 = vmul.f32 1.0, %v601
      %v603 = vrcp.pop %v579
      %v604 = vmul.f32 1.0, %v603
      %v605 = vrcp.pop %v580
      %v606 = vmul.f32 1.0, %v605
      %v607 = vrcp.pop %v581
      %v608 = vmul.f32 1.0, %v607
      %v609 = vrcp.pop %v582
      %v610 = vmul.f32 1.0, %v609
      %v611 = vrcp.pop %v583
      %v612 = vmul.f32 1.0, %v611
      %v613 = vrcp.pop %v584
      %v614 = vmul.f32 1.0, %v613
      %v615 = vrcp.pop %v585
      %v616 = vmul.f32 1.0, %v615
      %v617 = vrcp.pop %v586
      %v618 = vmul.f32 1.0, %v617
      %v619 = vmul.f32 %v507, %v588
      %v620 = vmul.f32 %v508, %v590
      %v621 = vmul.f32 %v509, %v592
      %v622 = vmul.f32 %v510, %v594
      %v623 = vmul.f32 %v511, %v596
      %v624 = vmul.f32 %v512, %v598
      %v625 = vmul.f32 %v513, %v600
      %v626 = vmul.f32 %v514, %v602
      %v627 = vmul.f32 %v515, %v604
      %v628 = vmul.f32 %v516, %v606
      %v629 = vmul.f32 %v517, %v608
      %v630 = vmul.f32 %v518, %v610
      %v631 = vmul.f32 %v519, %v612
      %v632 = vmul.f32 %v520, %v614
      %v633 = vmul.f32 %v521, %v616
      %v634 = vmul.f32 %v522, %v618
      %v635 = vld [vmem:[%s3] sm:$0xff]
      %v636 = vld [vmem:[%s3 + $0x8] sm:$0xff]
      %v637 = vld [vmem:[%s3 + $0x10] sm:$0xff]
      %v638 = vld [vmem:[%s3 + $0x18] sm:$0xff]
      %v639 = vld [vmem:[%s3 + $0x20] sm:$0xff]
      %v640 = vld [vmem:[%s3 + $0x28] sm:$0xff]
      %v641 = vld [vmem:[%s3 + $0x30] sm:$0xff]
      %v642 = vld [vmem:[%s3 + $0x38] sm:$0xff]
      %v643 = vld [vmem:[%s3 + $0x40] sm:$0xff]
      %v644 = vld [vmem:[%s3 + $0x48] sm:$0xff]
      %v645 = vld [vmem:[%s3 + $0x50] sm:$0xff]
      %v646 = vld [vmem:[%s3 + $0x58] sm:$0xff]
      %v647 = vld [vmem:[%s3 + $0x60] sm:$0xff]
      %v648 = vld [vmem:[%s3 + $0x68] sm:$0xff]
      %v649 = vld [vmem:[%s3 + $0x70] sm:$0xff]
      %v650 = vld [vmem:[%s3 + $0x78] sm:$0xff]
      %v651 = vld [vmem:[%s4] sm:$0x1]
      %v653 = vlaneseq
      %v654 = vshrl.u32 %v653, 7
      %v655 = vsub.s32 0, %v654
      %v656 = vrot.slane %v651, %v655
      %658 = vmatprep.subr.mxu0 0.0
      %659 = vmatpush1.msra.mxu0 %v650
      %660 = vmatprep.subr.mxu0 0.0
      %661 = vmatpush1.msra.mxu0 %v649
      %662 = vmatprep.subr.mxu0 0.0
      %663 = vmatpush1.msra.mxu0 %v648
      %664 = vmatprep.subr.mxu0 0.0
      %665 = vmatpush1.msra.mxu0 %v647
      %666 = vmatprep.subr.mxu0 0.0
      %667 = vmatpush1.msra.mxu0 %v646
      %668 = vmatprep.subr.mxu0 0.0
      %669 = vmatpush1.msra.mxu0 %v645
      %670 = vmatprep.subr.mxu0 0.0
      %671 = vmatpush1.msra.mxu0 %v644
      %672 = vmatprep.subr.mxu0 0.0
      %673 = vmatpush1.msra.mxu0 %v643
      %674 = vmatprep.subr.mxu0 0.0
      %675 = vmatpush1.msra.mxu0 %v642
      %676 = vmatprep.subr.mxu0 0.0
      %677 = vmatpush1.msra.mxu0 %v641
      %678 = vmatprep.subr.mxu0 0.0
      %679 = vmatpush1.msra.mxu0 %v640
      %680 = vmatprep.subr.mxu0 0.0
      %681 = vmatpush1.msra.mxu0 %v639
      %682 = vmatprep.subr.mxu0 0.0
      %683 = vmatpush1.msra.mxu0 %v638
      %684 = vmatprep.subr.mxu0 0.0
      %685 = vmatpush1.msra.mxu0 %v637
      %686 = vmatprep.subr.mxu0 0.0
      %687 = vmatpush1.msra.mxu0 %v636
      %688 = vmatprep.subr.mxu0 0.0
      %689 = vmatpush1.msra.mxu0 %v635
      %690 = vmatprep.subr.mxu0 0.0
      %691 = vmatpush2.msra.mxu0 0.0
      %692 = vmatprep.subr.mxu0 0.0
      %693 = vmatpush2.msra.mxu0 0.0
      %694 = vmatprep.subr.mxu0 0.0
      %695 = vmatpush2.msra.mxu0 0.0
      %696 = vmatprep.subr.mxu0 0.0
      %697 = vmatpush2.msra.mxu0 0.0
      %698 = vmatprep.subr.mxu0 0.0
      %699 = vmatpush2.msra.mxu0 0.0
      %700 = vmatprep.subr.mxu0 0.0
      %701 = vmatpush2.msra.mxu0 0.0
      %702 = vmatprep.subr.mxu0 0.0
      %703 = vmatpush2.msra.mxu0 0.0
      %704 = vmatprep.subr.mxu0 0.0
      %705 = vmatpush2.msra.mxu0 0.0
      %706 = vmatprep.subr.mxu0 0.0
      %707 = vmatpush2.msra.mxu0 0.0
      %708 = vmatprep.subr.mxu0 0.0
      %709 = vmatpush2.msra.mxu0 0.0
      %710 = vmatprep.subr.mxu0 0.0
      %711 = vmatpush2.msra.mxu0 0.0
      %712 = vmatprep.subr.mxu0 0.0
      %713 = vmatpush2.msra.mxu0 0.0
      %714 = vmatprep.subr.mxu0 0.0
      %715 = vmatpush2.msra.mxu0 0.0
      %716 = vmatprep.subr.mxu0 0.0
      %717 = vmatpush2.msra.mxu0 0.0
      %718 = vmatprep.subr.mxu0 0.0
      %719 = vmatpush2.msra.mxu0 0.0
      %720 = vmatprep.subr.mxu0 0.0
      %721 = vmatpush2.msra.mxu0 0.0
      %722 = vmatprep.mubr.f32.mxu0 0.0
      %723 = vmatmul.mubr.f32.gmra.mxu0 %v619
      %v724 = vpop.f32.mrf.mxu0
      %v725 = vadd.f32 %v656, %v724
      %v726 = vpop.f32.mrf.mxu0
      %727 = vmatprep.mubr.f32.mxu0 0.0
      %728 = vmatmul.mubr.f32.gmra.mxu0 %v620
      %v729 = vpop.f32.mrf.mxu0
      %v730 = vadd.f32 %v656, %v729
      %v731 = vpop.f32.mrf.mxu0
      %732 = vmatprep.mubr.f32.mxu0 0.0
      %733 = vmatmul.mubr.f32.gmra.mxu0 %v621
      %v734 = vpop.f32.mrf.mxu0
      %v735 = vadd.f32 %v656, %v734
      %v736 = vpop.f32.mrf.mxu0
      %737 = vmatprep.mubr.f32.mxu0 0.0
      %738 = vmatmul.mubr.f32.gmra.mxu0 %v622
      %v739 = vpop.f32.mrf.mxu0
      %v740 = vadd.f32 %v656, %v739
      %v741 = vpop.f32.mrf.mxu0
      %742 = vmatprep.mubr.f32.mxu0 0.0
      %743 = vmatmul.mubr.f32.gmra.mxu0 %v623
      %v744 = vpop.f32.mrf.mxu0
      %v745 = vadd.f32 %v656, %v744
      %v746 = vpop.f32.mrf.mxu0
      %747 = vmatprep.mubr.f32.mxu0 0.0
      %748 = vmatmul.mubr.f32.gmra.mxu0 %v624
      %v749 = vpop.f32.mrf.mxu0
      %v750 = vadd.f32 %v656, %v749
      %v751 = vpop.f32.mrf.mxu0
      %752 = vmatprep.mubr.f32.mxu0 0.0
      %753 = vmatmul.mubr.f32.gmra.mxu0 %v625
      %v754 = vpop.f32.mrf.mxu0
      %v755 = vadd.f32 %v656, %v754
      %v756 = vpop.f32.mrf.mxu0
      %757 = vmatprep.mubr.f32.mxu0 0.0
      %758 = vmatmul.mubr.f32.gmra.mxu0 %v626
      %v759 = vpop.f32.mrf.mxu0
      %v760 = vadd.f32 %v656, %v759
      %v761 = vpop.f32.mrf.mxu0
      %762 = vmatprep.mubr.f32.mxu0 0.0
      %763 = vmatmul.mubr.f32.gmra.mxu0 %v627
      %v764 = vpop.f32.mrf.mxu0
      %v765 = vadd.f32 %v656, %v764
      %v766 = vpop.f32.mrf.mxu0
      %767 = vmatprep.mubr.f32.mxu0 0.0
      %768 = vmatmul.mubr.f32.gmra.mxu0 %v628
      %v769 = vpop.f32.mrf.mxu0
      %v770 = vadd.f32 %v656, %v769
      %v771 = vpop.f32.mrf.mxu0
      %772 = vmatprep.mubr.f32.mxu0 0.0
      %773 = vmatmul.mubr.f32.gmra.mxu0 %v629
      %v774 = vpop.f32.mrf.mxu0
      %v775 = vadd.f32 %v656, %v774
      %v776 = vpop.f32.mrf.mxu0
      %777 = vmatprep.mubr.f32.mxu0 0.0
      %778 = vmatmul.mubr.f32.gmra.mxu0 %v630
      %v779 = vpop.f32.mrf.mxu0
      %v780 = vadd.f32 %v656, %v779
      %v781 = vpop.f32.mrf.mxu0
      %782 = vmatprep.mubr.f32.mxu0 0.0
      %783 = vmatmul.mubr.f32.gmra.mxu0 %v631
      %v784 = vpop.f32.mrf.mxu0
      %v785 = vadd.f32 %v656, %v784
      %v786 = vpop.f32.mrf.mxu0
      %787 = vmatprep.mubr.f32.mxu0 0.0
      %788 = vmatmul.mubr.f32.gmra.mxu0 %v632
      %v789 = vpop.f32.mrf.mxu0
      %v790 = vadd.f32 %v656, %v789
      %v791 = vpop.f32.mrf.mxu0
      %792 = vmatprep.mubr.f32.mxu0 0.0
      %793 = vmatmul.mubr.f32.gmra.mxu0 %v633
      %v794 = vpop.f32.mrf.mxu0
      %v795 = vadd.f32 %v656, %v794
      %v796 = vpop.f32.mrf.mxu0
      %797 = vmatprep.mubr.f32.mxu0 0.0
      %798 = vmatmul.mubr.f32.gmra.mxu0 %v634
      %v799 = vpop.f32.mrf.mxu0
      %v800 = vadd.f32 %v656, %v799
      %v801 = vpop.f32.mrf.mxu0
      %802 = vdwg.mxu0
      %v803 = vsub.f32 0.0, %v725
      %v804 = vsub.f32 0.0, %v730
      %v805 = vsub.f32 0.0, %v735
      %v806 = vsub.f32 0.0, %v740
      %v807 = vsub.f32 0.0, %v745
      %v808 = vsub.f32 0.0, %v750
      %v809 = vsub.f32 0.0, %v755
      %v810 = vsub.f32 0.0, %v760
      %v811 = vsub.f32 0.0, %v765
      %v812 = vsub.f32 0.0, %v770
      %v813 = vsub.f32 0.0, %v775
      %v814 = vsub.f32 0.0, %v780
      %v815 = vsub.f32 0.0, %v785
      %v816 = vsub.f32 0.0, %v790
      %v817 = vsub.f32 0.0, %v795
      %v818 = vsub.f32 0.0, %v800
      %v819 = vmul.f32 %v803, 1.442695
      %v820 = vpow.pop %v819
      %v821 = vmul.f32 %v804, 1.442695
      %v822 = vpow.pop %v821
      %v823 = vmul.f32 %v805, 1.442695
      %v824 = vpow.pop %v823
      %v825 = vmul.f32 %v806, 1.442695
      %v826 = vpow.pop %v825
      %v827 = vmul.f32 %v807, 1.442695
      %v828 = vpow.pop %v827
      %v829 = vmul.f32 %v808, 1.442695
      %v830 = vpow.pop %v829
      %v831 = vmul.f32 %v809, 1.442695
      %v832 = vpow.pop %v831
      %v833 = vmul.f32 %v810, 1.442695
      %v834 = vpow.pop %v833
      %v835 = vmul.f32 %v811, 1.442695
      %v836 = vpow.pop %v835
      %v837 = vmul.f32 %v812, 1.442695
      %v838 = vpow.pop %v837
      %v839 = vmul.f32 %v813, 1.442695
      %v840 = vpow.pop %v839
      %v841 = vmul.f32 %v814, 1.442695
      %v842 = vpow.pop %v841
      %v843 = vmul.f32 %v815, 1.442695
      %v844 = vpow.pop %v843
      %v845 = vmul.f32 %v816, 1.442695
      %v846 = vpow.pop %v845
      %v847 = vmul.f32 %v817, 1.442695
      %v848 = vpow.pop %v847
      %v849 = vmul.f32 %v818, 1.442695
      %v850 = vpow.pop %v849
      %v851 = vadd.f32 %v820, 1.0
      %v852 = vadd.f32 %v822, 1.0
      %v853 = vadd.f32 %v824, 1.0
      %v854 = vadd.f32 %v826, 1.0
      %v855 = vadd.f32 %v828, 1.0
      %v856 = vadd.f32 %v830, 1.0
      %v857 = vadd.f32 %v832, 1.0
      %v858 = vadd.f32 %v834, 1.0
      %v859 = vadd.f32 %v836, 1.0
      %v860 = vadd.f32 %v838, 1.0
      %v861 = vadd.f32 %v840, 1.0
      %v862 = vadd.f32 %v842, 1.0
      %v863 = vadd.f32 %v844, 1.0
      %v864 = vadd.f32 %v846, 1.0
      %v865 = vadd.f32 %v848, 1.0
      %v866 = vadd.f32 %v850, 1.0
      %v867 = vrcp.pop %v851
      %v868 = vmul.f32 1.0, %v867
      %v869 = vrcp.pop %v852
      %v870 = vmul.f32 1.0, %v869
      %v871 = vrcp.pop %v853
      %v872 = vmul.f32 1.0, %v871
      %v873 = vrcp.pop %v854
      %v874 = vmul.f32 1.0, %v873
      %v875 = vrcp.pop %v855
      %v876 = vmul.f32 1.0, %v875
      %v877 = vrcp.pop %v856
      %v878 = vmul.f32 1.0, %v877
      %v879 = vrcp.pop %v857
      %v880 = vmul.f32 1.0, %v879
      %v881 = vrcp.pop %v858
      %v882 = vmul.f32 1.0, %v881
      %v883 = vrcp.pop %v859
      %v884 = vmul.f32 1.0, %v883
      %v885 = vrcp.pop %v860
      %v886 = vmul.f32 1.0, %v885
      %v887 = vrcp.pop %v861
      %v888 = vmul.f32 1.0, %v887
      %v889 = vrcp.pop %v862
      %v890 = vmul.f32 1.0, %v889
      %v891 = vrcp.pop %v863
      %v892 = vmul.f32 1.0, %v891
      %v893 = vrcp.pop %v864
      %v894 = vmul.f32 1.0, %v893
      %v895 = vrcp.pop %v865
      %v896 = vmul.f32 1.0, %v895
      %v897 = vrcp.pop %v866
      %v898 = vmul.f32 1.0, %v897
      %v899 = vmul.f32 %v725, %v868
      %v900 = vmul.f32 %v730, %v870
      %v901 = vmul.f32 %v735, %v872
      %v902 = vmul.f32 %v740, %v874
      %v903 = vmul.f32 %v745, %v876
      %v904 = vmul.f32 %v750, %v878
      %v905 = vmul.f32 %v755, %v880
      %v906 = vmul.f32 %v760, %v882
      %v907 = vmul.f32 %v765, %v884
      %v908 = vmul.f32 %v770, %v886
      %v909 = vmul.f32 %v775, %v888
      %v910 = vmul.f32 %v780, %v890
      %v911 = vmul.f32 %v785, %v892
      %v912 = vmul.f32 %v790, %v894
      %v913 = vmul.f32 %v795, %v896
      %v914 = vmul.f32 %v800, %v898
      %s915 = scalar_lea.vmem %s3, 128
      %v916 = vld [vmem:[%s915] sm:$0xff]
      %v917 = vld [vmem:[%s915 + $0x8] sm:$0xff]
      %v918 = vld [vmem:[%s915 + $0x10] sm:$0xff]
      %v919 = vld [vmem:[%s915 + $0x18] sm:$0xff]
      %v920 = vld [vmem:[%s915 + $0x20] sm:$0xff]
      %v921 = vld [vmem:[%s915 + $0x28] sm:$0xff]
      %v922 = vld [vmem:[%s915 + $0x30] sm:$0xff]
      %v923 = vld [vmem:[%s915 + $0x38] sm:$0xff]
      %v924 = vld [vmem:[%s915 + $0x40] sm:$0xff]
      %v925 = vld [vmem:[%s915 + $0x48] sm:$0xff]
      %v926 = vld [vmem:[%s915 + $0x50] sm:$0xff]
      %v927 = vld [vmem:[%s915 + $0x58] sm:$0xff]
      %v928 = vld [vmem:[%s915 + $0x60] sm:$0xff]
      %v929 = vld [vmem:[%s915 + $0x68] sm:$0xff]
      %v930 = vld [vmem:[%s915 + $0x70] sm:$0xff]
      %v931 = vld [vmem:[%s915 + $0x78] sm:$0xff]
      %s932 = scalar_lea.vmem %s4, 1
      %v933 = vld [vmem:[%s932] sm:$0x1]
      %v935 = vlaneseq
      %v936 = vshrl.u32 %v935, 7
      %v937 = vsub.s32 0, %v936
      %v938 = vrot.slane %v933, %v937
      %940 = vmatprep.subr.mxu0 0.0
      %941 = vmatpush1.msra.mxu0 %v931
      %942 = vmatprep.subr.mxu0 0.0
      %943 = vmatpush1.msra.mxu0 %v930
      %944 = vmatprep.subr.mxu0 0.0
      %945 = vmatpush1.msra.mxu0 %v929
      %946 = vmatprep.subr.mxu0 0.0
      %947 = vmatpush1.msra.mxu0 %v928
      %948 = vmatprep.subr.mxu0 0.0
      %949 = vmatpush1.msra.mxu0 %v927
      %950 = vmatprep.subr.mxu0 0.0
      %951 = vmatpush1.msra.mxu0 %v926
      %952 = vmatprep.subr.mxu0 0.0
      %953 = vmatpush1.msra.mxu0 %v925
      %954 = vmatprep.subr.mxu0 0.0
      %955 = vmatpush1.msra.mxu0 %v924
      %956 = vmatprep.subr.mxu0 0.0
      %957 = vmatpush1.msra.mxu0 %v923
      %958 = vmatprep.subr.mxu0 0.0
      %959 = vmatpush1.msra.mxu0 %v922
      %960 = vmatprep.subr.mxu0 0.0
      %961 = vmatpush1.msra.mxu0 %v921
      %962 = vmatprep.subr.mxu0 0.0
      %963 = vmatpush1.msra.mxu0 %v920
      %964 = vmatprep.subr.mxu0 0.0
      %965 = vmatpush1.msra.mxu0 %v919
      %966 = vmatprep.subr.mxu0 0.0
      %967 = vmatpush1.msra.mxu0 %v918
      %968 = vmatprep.subr.mxu0 0.0
      %969 = vmatpush1.msra.mxu0 %v917
      %970 = vmatprep.subr.mxu0 0.0
      %971 = vmatpush1.msra.mxu0 %v916
      %972 = vmatprep.subr.mxu0 0.0
      %973 = vmatpush2.msra.mxu0 0.0
      %974 = vmatprep.subr.mxu0 0.0
      %975 = vmatpush2.msra.mxu0 0.0
      %976 = vmatprep.subr.mxu0 0.0
      %977 = vmatpush2.msra.mxu0 0.0
      %978 = vmatprep.subr.mxu0 0.0
      %979 = vmatpush2.msra.mxu0 0.0
      %980 = vmatprep.subr.mxu0 0.0
      %981 = vmatpush2.msra.mxu0 0.0
      %982 = vmatprep.subr.mxu0 0.0
      %983 = vmatpush2.msra.mxu0 0.0
      %984 = vmatprep.subr.mxu0 0.0
      %985 = vmatpush2.msra.mxu0 0.0
      %986 = vmatprep.subr.mxu0 0.0
      %987 = vmatpush2.msra.mxu0 0.0
      %988 = vmatprep.subr.mxu0 0.0
      %989 = vmatpush2.msra.mxu0 0.0
      %990 = vmatprep.subr.mxu0 0.0
      %991 = vmatpush2.msra.mxu0 0.0
      %992 = vmatprep.subr.mxu0 0.0
      %993 = vmatpush2.msra.mxu0 0.0
      %994 = vmatprep.subr.mxu0 0.0
      %995 = vmatpush2.msra.mxu0 0.0
      %996 = vmatprep.subr.mxu0 0.0
      %997 = vmatpush2.msra.mxu0 0.0
      %998 = vmatprep.subr.mxu0 0.0
      %999 = vmatpush2.msra.mxu0 0.0
      %1000 = vmatprep.subr.mxu0 0.0
      %1001 = vmatpush2.msra.mxu0 0.0
      %1002 = vmatprep.subr.mxu0 0.0
      %1003 = vmatpush2.msra.mxu0 0.0
      %1004 = vmatprep.mubr.f32.mxu0 0.0
      %1005 = vmatmul.mubr.f32.gmra.mxu0 %v899
      %v1006 = vpop.f32.mrf.mxu0
      %v1007 = vadd.f32 %v938, %v1006
      %v1008 = vpop.f32.mrf.mxu0
      %1009 = vmatprep.mubr.f32.mxu0 0.0
      %1010 = vmatmul.mubr.f32.gmra.mxu0 %v900
      %v1011 = vpop.f32.mrf.mxu0
      %v1012 = vadd.f32 %v938, %v1011
      %v1013 = vpop.f32.mrf.mxu0
      %1014 = vmatprep.mubr.f32.mxu0 0.0
      %1015 = vmatmul.mubr.f32.gmra.mxu0 %v901
      %v1016 = vpop.f32.mrf.mxu0
      %v1017 = vadd.f32 %v938, %v1016
      %v1018 = vpop.f32.mrf.mxu0
      %1019 = vmatprep.mubr.f32.mxu0 0.0
      %1020 = vmatmul.mubr.f32.gmra.mxu0 %v902
      %v1021 = vpop.f32.mrf.mxu0
      %v1022 = vadd.f32 %v938, %v1021
      %v1023 = vpop.f32.mrf.mxu0
      %1024 = vmatprep.mubr.f32.mxu0 0.0
      %1025 = vmatmul.mubr.f32.gmra.mxu0 %v903
      %v1026 = vpop.f32.mrf.mxu0
      %v1027 = vadd.f32 %v938, %v1026
      %v1028 = vpop.f32.mrf.mxu0
      %1029 = vmatprep.mubr.f32.mxu0 0.0
      %1030 = vmatmul.mubr.f32.gmra.mxu0 %v904
      %v1031 = vpop.f32.mrf.mxu0
      %v1032 = vadd.f32 %v938, %v1031
      %v1033 = vpop.f32.mrf.mxu0
      %1034 = vmatprep.mubr.f32.mxu0 0.0
      %1035 = vmatmul.mubr.f32.gmra.mxu0 %v905
      %v1036 = vpop.f32.mrf.mxu0
      %v1037 = vadd.f32 %v938, %v1036
      %v1038 = vpop.f32.mrf.mxu0
      %1039 = vmatprep.mubr.f32.mxu0 0.0
      %1040 = vmatmul.mubr.f32.gmra.mxu0 %v906
      %v1041 = vpop.f32.mrf.mxu0
      %v1042 = vadd.f32 %v938, %v1041
      %v1043 = vpop.f32.mrf.mxu0
      %1044 = vmatprep.mubr.f32.mxu0 0.0
      %1045 = vmatmul.mubr.f32.gmra.mxu0 %v907
      %v1046 = vpop.f32.mrf.mxu0
      %v1047 = vadd.f32 %v938, %v1046
      %v1048 = vpop.f32.mrf.mxu0
      %1049 = vmatprep.mubr.f32.mxu0 0.0
      %1050 = vmatmul.mubr.f32.gmra.mxu0 %v908
      %v1051 = vpop.f32.mrf.mxu0
      %v1052 = vadd.f32 %v938, %v1051
      %v1053 = vpop.f32.mrf.mxu0
      %1054 = vmatprep.mubr.f32.mxu0 0.0
      %1055 = vmatmul.mubr.f32.gmra.mxu0 %v909
      %v1056 = vpop.f32.mrf.mxu0
      %v1057 = vadd.f32 %v938, %v1056
      %v1058 = vpop.f32.mrf.mxu0
      %1059 = vmatprep.mubr.f32.mxu0 0.0
      %1060 = vmatmul.mubr.f32.gmra.mxu0 %v910
      %v1061 = vpop.f32.mrf.mxu0
      %v1062 = vadd.f32 %v938, %v1061
      %v1063 = vpop.f32.mrf.mxu0
      %1064 = vmatprep.mubr.f32.mxu0 0.0
      %1065 = vmatmul.mubr.f32.gmra.mxu0 %v911
      %v1066 = vpop.f32.mrf.mxu0
      %v1067 = vadd.f32 %v938, %v1066
      %v1068 = vpop.f32.mrf.mxu0
      %1069 = vmatprep.mubr.f32.mxu0 0.0
      %1070 = vmatmul.mubr.f32.gmra.mxu0 %v912
      %v1071 = vpop.f32.mrf.mxu0
      %v1072 = vadd.f32 %v938, %v1071
      %v1073 = vpop.f32.mrf.mxu0
      %1074 = vmatprep.mubr.f32.mxu0 0.0
      %1075 = vmatmul.mubr.f32.gmra.mxu0 %v913
      %v1076 = vpop.f32.mrf.mxu0
      %v1077 = vadd.f32 %v938, %v1076
      %v1078 = vpop.f32.mrf.mxu0
      %1079 = vmatprep.mubr.f32.mxu0 0.0
      %1080 = vmatmul.mubr.f32.gmra.mxu0 %v914
      %v1081 = vpop.f32.mrf.mxu0
      %v1082 = vadd.f32 %v938, %v1081
      %v1083 = vpop.f32.mrf.mxu0
      %1084 = vdwg.mxu0
      %v1085 = vsub.f32 0.0, %v1007
      %v1086 = vsub.f32 0.0, %v1012
      %v1087 = vsub.f32 0.0, %v1017
      %v1088 = vsub.f32 0.0, %v1022
      %v1089 = vsub.f32 0.0, %v1027
      %v1090 = vsub.f32 0.0, %v1032
      %v1091 = vsub.f32 0.0, %v1037
      %v1092 = vsub.f32 0.0, %v1042
      %v1093 = vsub.f32 0.0, %v1047
      %v1094 = vsub.f32 0.0, %v1052
      %v1095 = vsub.f32 0.0, %v1057
      %v1096 = vsub.f32 0.0, %v1062
      %v1097 = vsub.f32 0.0, %v1067
      %v1098 = vsub.f32 0.0, %v1072
      %v1099 = vsub.f32 0.0, %v1077
      %v1100 = vsub.f32 0.0, %v1082
      %v1101 = vmul.f32 %v1085, 1.442695
      %v1102 = vpow.pop %v1101
      %v1103 = vmul.f32 %v1086, 1.442695
      %v1104 = vpow.pop %v1103
      %v1105 = vmul.f32 %v1087, 1.442695
      %v1106 = vpow.pop %v1105
      %v1107 = vmul.f32 %v1088, 1.442695
      %v1108 = vpow.pop %v1107
      %v1109 = vmul.f32 %v1089, 1.442695
      %v1110 = vpow.pop %v1109
      %v1111 = vmul.f32 %v1090, 1.442695
      %v1112 = vpow.pop %v1111
      %v1113 = vmul.f32 %v1091, 1.442695
      %v1114 = vpow.pop %v1113
      %v1115 = vmul.f32 %v1092, 1.442695
      %v1116 = vpow.pop %v1115
      %v1117 = vmul.f32 %v1093, 1.442695
      %v1118 = vpow.pop %v1117
      %v1119 = vmul.f32 %v1094, 1.442695
      %v1120 = vpow.pop %v1119
      %v1121 = vmul.f32 %v1095, 1.442695
      %v1122 = vpow.pop %v1121
      %v1123 = vmul.f32 %v1096, 1.442695
      %v1124 = vpow.pop %v1123
      %v1125 = vmul.f32 %v1097, 1.442695
      %v1126 = vpow.pop %v1125
      %v1127 = vmul.f32 %v1098, 1.442695
      %v1128 = vpow.pop %v1127
      %v1129 = vmul.f32 %v1099, 1.442695
      %v1130 = vpow.pop %v1129
      %v1131 = vmul.f32 %v1100, 1.442695
      %v1132 = vpow.pop %v1131
      %v1133 = vadd.f32 %v1102, 1.0
      %v1134 = vadd.f32 %v1104, 1.0
      %v1135 = vadd.f32 %v1106, 1.0
      %v1136 = vadd.f32 %v1108, 1.0
      %v1137 = vadd.f32 %v1110, 1.0
      %v1138 = vadd.f32 %v1112, 1.0
      %v1139 = vadd.f32 %v1114, 1.0
      %v1140 = vadd.f32 %v1116, 1.0
      %v1141 = vadd.f32 %v1118, 1.0
      %v1142 = vadd.f32 %v1120, 1.0
      %v1143 = vadd.f32 %v1122, 1.0
      %v1144 = vadd.f32 %v1124, 1.0
      %v1145 = vadd.f32 %v1126, 1.0
      %v1146 = vadd.f32 %v1128, 1.0
      %v1147 = vadd.f32 %v1130, 1.0
      %v1148 = vadd.f32 %v1132, 1.0
      %v1149 = vrcp.pop %v1133
      %v1150 = vmul.f32 1.0, %v1149
      %v1151 = vrcp.pop %v1134
      %v1152 = vmul.f32 1.0, %v1151
      %v1153 = vrcp.pop %v1135
      %v1154 = vmul.f32 1.0, %v1153
      %v1155 = vrcp.pop %v1136
      %v1156 = vmul.f32 1.0, %v1155
      %v1157 = vrcp.pop %v1137
      %v1158 = vmul.f32 1.0, %v1157
      %v1159 = vrcp.pop %v1138
      %v1160 = vmul.f32 1.0, %v1159
      %v1161 = vrcp.pop %v1139
      %v1162 = vmul.f32 1.0, %v1161
      %v1163 = vrcp.pop %v1140
      %v1164 = vmul.f32 1.0, %v1163
      %v1165 = vrcp.pop %v1141
      %v1166 = vmul.f32 1.0, %v1165
      %v1167 = vrcp.pop %v1142
      %v1168 = vmul.f32 1.0, %v1167
      %v1169 = vrcp.pop %v1143
      %v1170 = vmul.f32 1.0, %v1169
      %v1171 = vrcp.pop %v1144
      %v1172 = vmul.f32 1.0, %v1171
      %v1173 = vrcp.pop %v1145
      %v1174 = vmul.f32 1.0, %v1173
      %v1175 = vrcp.pop %v1146
      %v1176 = vmul.f32 1.0, %v1175
      %v1177 = vrcp.pop %v1147
      %v1178 = vmul.f32 1.0, %v1177
      %v1179 = vrcp.pop %v1148
      %v1180 = vmul.f32 1.0, %v1179
      %v1181 = vmul.f32 %v1007, %v1150
      %v1182 = vmul.f32 %v1012, %v1152
      %v1183 = vmul.f32 %v1017, %v1154
      %v1184 = vmul.f32 %v1022, %v1156
      %v1185 = vmul.f32 %v1027, %v1158
      %v1186 = vmul.f32 %v1032, %v1160
      %v1187 = vmul.f32 %v1037, %v1162
      %v1188 = vmul.f32 %v1042, %v1164
      %v1189 = vmul.f32 %v1047, %v1166
      %v1190 = vmul.f32 %v1052, %v1168
      %v1191 = vmul.f32 %v1057, %v1170
      %v1192 = vmul.f32 %v1062, %v1172
      %v1193 = vmul.f32 %v1067, %v1174
      %v1194 = vmul.f32 %v1072, %v1176
      %v1195 = vmul.f32 %v1077, %v1178
      %v1196 = vmul.f32 %v1082, %v1180
      %s1197 = scalar_lea.vmem %s3, 256
      %v1198 = vld [vmem:[%s1197] sm:$0xff]
      %v1199 = vld [vmem:[%s1197 + $0x8] sm:$0xff]
      %v1200 = vld [vmem:[%s1197 + $0x10] sm:$0xff]
      %v1201 = vld [vmem:[%s1197 + $0x18] sm:$0xff]
      %v1202 = vld [vmem:[%s1197 + $0x20] sm:$0xff]
      %v1203 = vld [vmem:[%s1197 + $0x28] sm:$0xff]
      %v1204 = vld [vmem:[%s1197 + $0x30] sm:$0xff]
      %v1205 = vld [vmem:[%s1197 + $0x38] sm:$0xff]
      %v1206 = vld [vmem:[%s1197 + $0x40] sm:$0xff]
      %v1207 = vld [vmem:[%s1197 + $0x48] sm:$0xff]
      %v1208 = vld [vmem:[%s1197 + $0x50] sm:$0xff]
      %v1209 = vld [vmem:[%s1197 + $0x58] sm:$0xff]
      %v1210 = vld [vmem:[%s1197 + $0x60] sm:$0xff]
      %v1211 = vld [vmem:[%s1197 + $0x68] sm:$0xff]
      %v1212 = vld [vmem:[%s1197 + $0x70] sm:$0xff]
      %v1213 = vld [vmem:[%s1197 + $0x78] sm:$0xff]
      %s1214 = scalar_lea.vmem %s4, 2
      %v1215 = vld [vmem:[%s1214] sm:$0x1]
      %v1217 = vlaneseq
      %v1218 = vshrl.u32 %v1217, 7
      %v1219 = vsub.s32 0, %v1218
      %v1220 = vrot.slane %v1215, %v1219
      %1222 = vmatprep.subr.mxu0 0.0
      %1223 = vmatpush1.msra.mxu0 %v1213
      %1224 = vmatprep.subr.mxu0 0.0
      %1225 = vmatpush1.msra.mxu0 %v1212
      %1226 = vmatprep.subr.mxu0 0.0
      %1227 = vmatpush1.msra.mxu0 %v1211
      %1228 = vmatprep.subr.mxu0 0.0
      %1229 = vmatpush1.msra.mxu0 %v1210
      %1230 = vmatprep.subr.mxu0 0.0
      %1231 = vmatpush1.msra.mxu0 %v1209
      %1232 = vmatprep.subr.mxu0 0.0
      %1233 = vmatpush1.msra.mxu0 %v1208
      %1234 = vmatprep.subr.mxu0 0.0
      %1235 = vmatpush1.msra.mxu0 %v1207
      %1236 = vmatprep.subr.mxu0 0.0
      %1237 = vmatpush1.msra.mxu0 %v1206
      %1238 = vmatprep.subr.mxu0 0.0
      %1239 = vmatpush1.msra.mxu0 %v1205
      %1240 = vmatprep.subr.mxu0 0.0
      %1241 = vmatpush1.msra.mxu0 %v1204
      %1242 = vmatprep.subr.mxu0 0.0
      %1243 = vmatpush1.msra.mxu0 %v1203
      %1244 = vmatprep.subr.mxu0 0.0
      %1245 = vmatpush1.msra.mxu0 %v1202
      %1246 = vmatprep.subr.mxu0 0.0
      %1247 = vmatpush1.msra.mxu0 %v1201
      %1248 = vmatprep.subr.mxu0 0.0
      %1249 = vmatpush1.msra.mxu0 %v1200
      %1250 = vmatprep.subr.mxu0 0.0
      %1251 = vmatpush1.msra.mxu0 %v1199
      %1252 = vmatprep.subr.mxu0 0.0
      %1253 = vmatpush1.msra.mxu0 %v1198
      %1254 = vmatprep.subr.mxu0 0.0
      %1255 = vmatpush2.msra.mxu0 0.0
      %1256 = vmatprep.subr.mxu0 0.0
      %1257 = vmatpush2.msra.mxu0 0.0
      %1258 = vmatprep.subr.mxu0 0.0
      %1259 = vmatpush2.msra.mxu0 0.0
      %1260 = vmatprep.subr.mxu0 0.0
      %1261 = vmatpush2.msra.mxu0 0.0
      %1262 = vmatprep.subr.mxu0 0.0
      %1263 = vmatpush2.msra.mxu0 0.0
      %1264 = vmatprep.subr.mxu0 0.0
      %1265 = vmatpush2.msra.mxu0 0.0
      %1266 = vmatprep.subr.mxu0 0.0
      %1267 = vmatpush2.msra.mxu0 0.0
      %1268 = vmatprep.subr.mxu0 0.0
      %1269 = vmatpush2.msra.mxu0 0.0
      %1270 = vmatprep.subr.mxu0 0.0
      %1271 = vmatpush2.msra.mxu0 0.0
      %1272 = vmatprep.subr.mxu0 0.0
      %1273 = vmatpush2.msra.mxu0 0.0
      %1274 = vmatprep.subr.mxu0 0.0
      %1275 = vmatpush2.msra.mxu0 0.0
      %1276 = vmatprep.subr.mxu0 0.0
      %1277 = vmatpush2.msra.mxu0 0.0
      %1278 = vmatprep.subr.mxu0 0.0
      %1279 = vmatpush2.msra.mxu0 0.0
      %1280 = vmatprep.subr.mxu0 0.0
      %1281 = vmatpush2.msra.mxu0 0.0
      %1282 = vmatprep.subr.mxu0 0.0
      %1283 = vmatpush2.msra.mxu0 0.0
      %1284 = vmatprep.subr.mxu0 0.0
      %1285 = vmatpush2.msra.mxu0 0.0
      %1286 = vmatprep.mubr.f32.mxu0 0.0
      %1287 = vmatmul.mubr.f32.gmra.mxu0 %v1181
      %v1288 = vpop.f32.mrf.mxu0
      %v1289 = vadd.f32 %v1220, %v1288
      %v1290 = vpop.f32.mrf.mxu0
      %1291 = vmatprep.mubr.f32.mxu0 0.0
      %1292 = vmatmul.mubr.f32.gmra.mxu0 %v1182
      %v1293 = vpop.f32.mrf.mxu0
      %v1294 = vadd.f32 %v1220, %v1293
      %v1295 = vpop.f32.mrf.mxu0
      %1296 = vmatprep.mubr.f32.mxu0 0.0
      %1297 = vmatmul.mubr.f32.gmra.mxu0 %v1183
      %v1298 = vpop.f32.mrf.mxu0
      %v1299 = vadd.f32 %v1220, %v1298
      %v1300 = vpop.f32.mrf.mxu0
      %1301 = vmatprep.mubr.f32.mxu0 0.0
      %1302 = vmatmul.mubr.f32.gmra.mxu0 %v1184
      %v1303 = vpop.f32.mrf.mxu0
      %v1304 = vadd.f32 %v1220, %v1303
      %v1305 = vpop.f32.mrf.mxu0
      %1306 = vmatprep.mubr.f32.mxu0 0.0
      %1307 = vmatmul.mubr.f32.gmra.mxu0 %v1185
      %v1308 = vpop.f32.mrf.mxu0
      %v1309 = vadd.f32 %v1220, %v1308
      %v1310 = vpop.f32.mrf.mxu0
      %1311 = vmatprep.mubr.f32.mxu0 0.0
      %1312 = vmatmul.mubr.f32.gmra.mxu0 %v1186
      %v1313 = vpop.f32.mrf.mxu0
      %v1314 = vadd.f32 %v1220, %v1313
      %v1315 = vpop.f32.mrf.mxu0
      %1316 = vmatprep.mubr.f32.mxu0 0.0
      %1317 = vmatmul.mubr.f32.gmra.mxu0 %v1187
      %v1318 = vpop.f32.mrf.mxu0
      %v1319 = vadd.f32 %v1220, %v1318
      %v1320 = vpop.f32.mrf.mxu0
      %1321 = vmatprep.mubr.f32.mxu0 0.0
      %1322 = vmatmul.mubr.f32.gmra.mxu0 %v1188
      %v1323 = vpop.f32.mrf.mxu0
      %v1324 = vadd.f32 %v1220, %v1323
      %v1325 = vpop.f32.mrf.mxu0
      %1326 = vmatprep.mubr.f32.mxu0 0.0
      %1327 = vmatmul.mubr.f32.gmra.mxu0 %v1189
      %v1328 = vpop.f32.mrf.mxu0
      %v1329 = vadd.f32 %v1220, %v1328
      %v1330 = vpop.f32.mrf.mxu0
      %1331 = vmatprep.mubr.f32.mxu0 0.0
      %1332 = vmatmul.mubr.f32.gmra.mxu0 %v1190
      %v1333 = vpop.f32.mrf.mxu0
      %v1334 = vadd.f32 %v1220, %v1333
      %v1335 = vpop.f32.mrf.mxu0
      %1336 = vmatprep.mubr.f32.mxu0 0.0
      %1337 = vmatmul.mubr.f32.gmra.mxu0 %v1191
      %v1338 = vpop.f32.mrf.mxu0
      %v1339 = vadd.f32 %v1220, %v1338
      %v1340 = vpop.f32.mrf.mxu0
      %1341 = vmatprep.mubr.f32.mxu0 0.0
      %1342 = vmatmul.mubr.f32.gmra.mxu0 %v1192
      %v1343 = vpop.f32.mrf.mxu0
      %v1344 = vadd.f32 %v1220, %v1343
      %v1345 = vpop.f32.mrf.mxu0
      %1346 = vmatprep.mubr.f32.mxu0 0.0
      %1347 = vmatmul.mubr.f32.gmra.mxu0 %v1193
      %v1348 = vpop.f32.mrf.mxu0
      %v1349 = vadd.f32 %v1220, %v1348
      %v1350 = vpop.f32.mrf.mxu0
      %1351 = vmatprep.mubr.f32.mxu0 0.0
      %1352 = vmatmul.mubr.f32.gmra.mxu0 %v1194
      %v1353 = vpop.f32.mrf.mxu0
      %v1354 = vadd.f32 %v1220, %v1353
      %v1355 = vpop.f32.mrf.mxu0
      %1356 = vmatprep.mubr.f32.mxu0 0.0
      %1357 = vmatmul.mubr.f32.gmra.mxu0 %v1195
      %v1358 = vpop.f32.mrf.mxu0
      %v1359 = vadd.f32 %v1220, %v1358
      %v1360 = vpop.f32.mrf.mxu0
      %1361 = vmatprep.mubr.f32.mxu0 0.0
      %1362 = vmatmul.mubr.f32.gmra.mxu0 %v1196
      %v1363 = vpop.f32.mrf.mxu0
      %v1364 = vadd.f32 %v1220, %v1363
      %v1365 = vpop.f32.mrf.mxu0
      %1366 = vdwg.mxu0
      %v1367 = vsub.f32 0.0, %v1289
      %v1368 = vsub.f32 0.0, %v1294
      %v1369 = vsub.f32 0.0, %v1299
      %v1370 = vsub.f32 0.0, %v1304
      %v1371 = vsub.f32 0.0, %v1309
      %v1372 = vsub.f32 0.0, %v1314
      %v1373 = vsub.f32 0.0, %v1319
      %v1374 = vsub.f32 0.0, %v1324
      %v1375 = vsub.f32 0.0, %v1329
      %v1376 = vsub.f32 0.0, %v1334
      %v1377 = vsub.f32 0.0, %v1339
      %v1378 = vsub.f32 0.0, %v1344
      %v1379 = vsub.f32 0.0, %v1349
      %v1380 = vsub.f32 0.0, %v1354
      %v1381 = vsub.f32 0.0, %v1359
      %v1382 = vsub.f32 0.0, %v1364
      %v1383 = vmul.f32 %v1367, 1.442695
      %v1384 = vpow.pop %v1383
      %v1385 = vmul.f32 %v1368, 1.442695
      %v1386 = vpow.pop %v1385
      %v1387 = vmul.f32 %v1369, 1.442695
      %v1388 = vpow.pop %v1387
      %v1389 = vmul.f32 %v1370, 1.442695
      %v1390 = vpow.pop %v1389
      %v1391 = vmul.f32 %v1371, 1.442695
      %v1392 = vpow.pop %v1391
      %v1393 = vmul.f32 %v1372, 1.442695
      %v1394 = vpow.pop %v1393
      %v1395 = vmul.f32 %v1373, 1.442695
      %v1396 = vpow.pop %v1395
      %v1397 = vmul.f32 %v1374, 1.442695
      %v1398 = vpow.pop %v1397
      %v1399 = vmul.f32 %v1375, 1.442695
      %v1400 = vpow.pop %v1399
      %v1401 = vmul.f32 %v1376, 1.442695
      %v1402 = vpow.pop %v1401
      %v1403 = vmul.f32 %v1377, 1.442695
      %v1404 = vpow.pop %v1403
      %v1405 = vmul.f32 %v1378, 1.442695
      %v1406 = vpow.pop %v1405
      %v1407 = vmul.f32 %v1379, 1.442695
      %v1408 = vpow.pop %v1407
      %v1409 = vmul.f32 %v1380, 1.442695
      %v1410 = vpow.pop %v1409
      %v1411 = vmul.f32 %v1381, 1.442695
      %v1412 = vpow.pop %v1411
      %v1413 = vmul.f32 %v1382, 1.442695
      %v1414 = vpow.pop %v1413
      %v1415 = vadd.f32 %v1384, 1.0
      %v1416 = vadd.f32 %v1386, 1.0
      %v1417 = vadd.f32 %v1388, 1.0
      %v1418 = vadd.f32 %v1390, 1.0
      %v1419 = vadd.f32 %v1392, 1.0
      %v1420 = vadd.f32 %v1394, 1.0
      %v1421 = vadd.f32 %v1396, 1.0
      %v1422 = vadd.f32 %v1398, 1.0
      %v1423 = vadd.f32 %v1400, 1.0
      %v1424 = vadd.f32 %v1402, 1.0
      %v1425 = vadd.f32 %v1404, 1.0
      %v1426 = vadd.f32 %v1406, 1.0
      %v1427 = vadd.f32 %v1408, 1.0
      %v1428 = vadd.f32 %v1410, 1.0
      %v1429 = vadd.f32 %v1412, 1.0
      %v1430 = vadd.f32 %v1414, 1.0
      %v1431 = vrcp.pop %v1415
      %v1432 = vmul.f32 1.0, %v1431
      %v1433 = vrcp.pop %v1416
      %v1434 = vmul.f32 1.0, %v1433
      %v1435 = vrcp.pop %v1417
      %v1436 = vmul.f32 1.0, %v1435
      %v1437 = vrcp.pop %v1418
      %v1438 = vmul.f32 1.0, %v1437
      %v1439 = vrcp.pop %v1419
      %v1440 = vmul.f32 1.0, %v1439
      %v1441 = vrcp.pop %v1420
      %v1442 = vmul.f32 1.0, %v1441
      %v1443 = vrcp.pop %v1421
      %v1444 = vmul.f32 1.0, %v1443
      %v1445 = vrcp.pop %v1422
      %v1446 = vmul.f32 1.0, %v1445
      %v1447 = vrcp.pop %v1423
      %v1448 = vmul.f32 1.0, %v1447
      %v1449 = vrcp.pop %v1424
      %v1450 = vmul.f32 1.0, %v1449
      %v1451 = vrcp.pop %v1425
      %v1452 = vmul.f32 1.0, %v1451
      %v1453 = vrcp.pop %v1426
      %v1454 = vmul.f32 1.0, %v1453
      %v1455 = vrcp.pop %v1427
      %v1456 = vmul.f32 1.0, %v1455
      %v1457 = vrcp.pop %v1428
      %v1458 = vmul.f32 1.0, %v1457
      %v1459 = vrcp.pop %v1429
      %v1460 = vmul.f32 1.0, %v1459
      %v1461 = vrcp.pop %v1430
      %v1462 = vmul.f32 1.0, %v1461
      %v1463 = vmul.f32 %v1289, %v1432
      %v1464 = vmul.f32 %v1294, %v1434
      %v1465 = vmul.f32 %v1299, %v1436
      %v1466 = vmul.f32 %v1304, %v1438
      %v1467 = vmul.f32 %v1309, %v1440
      %v1468 = vmul.f32 %v1314, %v1442
      %v1469 = vmul.f32 %v1319, %v1444
      %v1470 = vmul.f32 %v1324, %v1446
      %v1471 = vmul.f32 %v1329, %v1448
      %v1472 = vmul.f32 %v1334, %v1450
      %v1473 = vmul.f32 %v1339, %v1452
      %v1474 = vmul.f32 %v1344, %v1454
      %v1475 = vmul.f32 %v1349, %v1456
      %v1476 = vmul.f32 %v1354, %v1458
      %v1477 = vmul.f32 %v1359, %v1460
      %v1478 = vmul.f32 %v1364, %v1462
      %s1479 = scalar_lea.vmem %s3, 384
      %v1480 = vld [vmem:[%s1479] sm:$0xff]
      %v1481 = vld [vmem:[%s1479 + $0x8] sm:$0xff]
      %v1482 = vld [vmem:[%s1479 + $0x10] sm:$0xff]
      %v1483 = vld [vmem:[%s1479 + $0x18] sm:$0xff]
      %v1484 = vld [vmem:[%s1479 + $0x20] sm:$0xff]
      %v1485 = vld [vmem:[%s1479 + $0x28] sm:$0xff]
      %v1486 = vld [vmem:[%s1479 + $0x30] sm:$0xff]
      %v1487 = vld [vmem:[%s1479 + $0x38] sm:$0xff]
      %v1488 = vld [vmem:[%s1479 + $0x40] sm:$0xff]
      %v1489 = vld [vmem:[%s1479 + $0x48] sm:$0xff]
      %v1490 = vld [vmem:[%s1479 + $0x50] sm:$0xff]
      %v1491 = vld [vmem:[%s1479 + $0x58] sm:$0xff]
      %v1492 = vld [vmem:[%s1479 + $0x60] sm:$0xff]
      %v1493 = vld [vmem:[%s1479 + $0x68] sm:$0xff]
      %v1494 = vld [vmem:[%s1479 + $0x70] sm:$0xff]
      %v1495 = vld [vmem:[%s1479 + $0x78] sm:$0xff]
      %s1496 = scalar_lea.vmem %s4, 3
      %v1497 = vld [vmem:[%s1496] sm:$0x1]
      %v1499 = vlaneseq
      %v1500 = vshrl.u32 %v1499, 7
      %v1501 = vsub.s32 0, %v1500
      %v1502 = vrot.slane %v1497, %v1501
      %1504 = vmatprep.subr.mxu0 0.0
      %1505 = vmatpush1.msra.mxu0 %v1495
      %1506 = vmatprep.subr.mxu0 0.0
      %1507 = vmatpush1.msra.mxu0 %v1494
      %1508 = vmatprep.subr.mxu0 0.0
      %1509 = vmatpush1.msra.mxu0 %v1493
      %1510 = vmatprep.subr.mxu0 0.0
      %1511 = vmatpush1.msra.mxu0 %v1492
      %1512 = vmatprep.subr.mxu0 0.0
      %1513 = vmatpush1.msra.mxu0 %v1491
      %1514 = vmatprep.subr.mxu0 0.0
      %1515 = vmatpush1.msra.mxu0 %v1490
      %1516 = vmatprep.subr.mxu0 0.0
      %1517 = vmatpush1.msra.mxu0 %v1489
      %1518 = vmatprep.subr.mxu0 0.0
      %1519 = vmatpush1.msra.mxu0 %v1488
      %1520 = vmatprep.subr.mxu0 0.0
      %1521 = vmatpush1.msra.mxu0 %v1487
      %1522 = vmatprep.subr.mxu0 0.0
      %1523 = vmatpush1.msra.mxu0 %v1486
      %1524 = vmatprep.subr.mxu0 0.0
      %1525 = vmatpush1.msra.mxu0 %v1485
      %1526 = vmatprep.subr.mxu0 0.0
      %1527 = vmatpush1.msra.mxu0 %v1484
      %1528 = vmatprep.subr.mxu0 0.0
      %1529 = vmatpush1.msra.mxu0 %v1483
      %1530 = vmatprep.subr.mxu0 0.0
      %1531 = vmatpush1.msra.mxu0 %v1482
      %1532 = vmatprep.subr.mxu0 0.0
      %1533 = vmatpush1.msra.mxu0 %v1481
      %1534 = vmatprep.subr.mxu0 0.0
      %1535 = vmatpush1.msra.mxu0 %v1480
      %1536 = vmatprep.subr.mxu0 0.0
      %1537 = vmatpush2.msra.mxu0 0.0
      %1538 = vmatprep.subr.mxu0 0.0
      %1539 = vmatpush2.msra.mxu0 0.0
      %1540 = vmatprep.subr.mxu0 0.0
      %1541 = vmatpush2.msra.mxu0 0.0
      %1542 = vmatprep.subr.mxu0 0.0
      %1543 = vmatpush2.msra.mxu0 0.0
      %1544 = vmatprep.subr.mxu0 0.0
      %1545 = vmatpush2.msra.mxu0 0.0
      %1546 = vmatprep.subr.mxu0 0.0
      %1547 = vmatpush2.msra.mxu0 0.0
      %1548 = vmatprep.subr.mxu0 0.0
      %1549 = vmatpush2.msra.mxu0 0.0
      %1550 = vmatprep.subr.mxu0 0.0
      %1551 = vmatpush2.msra.mxu0 0.0
      %1552 = vmatprep.subr.mxu0 0.0
      %1553 = vmatpush2.msra.mxu0 0.0
      %1554 = vmatprep.subr.mxu0 0.0
      %1555 = vmatpush2.msra.mxu0 0.0
      %1556 = vmatprep.subr.mxu0 0.0
      %1557 = vmatpush2.msra.mxu0 0.0
      %1558 = vmatprep.subr.mxu0 0.0
      %1559 = vmatpush2.msra.mxu0 0.0
      %1560 = vmatprep.subr.mxu0 0.0
      %1561 = vmatpush2.msra.mxu0 0.0
      %1562 = vmatprep.subr.mxu0 0.0
      %1563 = vmatpush2.msra.mxu0 0.0
      %1564 = vmatprep.subr.mxu0 0.0
      %1565 = vmatpush2.msra.mxu0 0.0
      %1566 = vmatprep.subr.mxu0 0.0
      %1567 = vmatpush2.msra.mxu0 0.0
      %1568 = vmatprep.mubr.f32.mxu0 0.0
      %1569 = vmatmul.mubr.f32.gmra.mxu0 %v1463
      %v1570 = vpop.f32.mrf.mxu0
      %v1571 = vadd.f32 %v1502, %v1570
      %v1572 = vpop.f32.mrf.mxu0
      %1573 = vmatprep.mubr.f32.mxu0 0.0
      %1574 = vmatmul.mubr.f32.gmra.mxu0 %v1464
      %v1575 = vpop.f32.mrf.mxu0
      %v1576 = vadd.f32 %v1502, %v1575
      %v1577 = vpop.f32.mrf.mxu0
      %1578 = vmatprep.mubr.f32.mxu0 0.0
      %1579 = vmatmul.mubr.f32.gmra.mxu0 %v1465
      %v1580 = vpop.f32.mrf.mxu0
      %v1581 = vadd.f32 %v1502, %v1580
      %v1582 = vpop.f32.mrf.mxu0
      %1583 = vmatprep.mubr.f32.mxu0 0.0
      %1584 = vmatmul.mubr.f32.gmra.mxu0 %v1466
      %v1585 = vpop.f32.mrf.mxu0
      %v1586 = vadd.f32 %v1502, %v1585
      %v1587 = vpop.f32.mrf.mxu0
      %1588 = vmatprep.mubr.f32.mxu0 0.0
      %1589 = vmatmul.mubr.f32.gmra.mxu0 %v1467
      %v1590 = vpop.f32.mrf.mxu0
      %v1591 = vadd.f32 %v1502, %v1590
      %v1592 = vpop.f32.mrf.mxu0
      %1593 = vmatprep.mubr.f32.mxu0 0.0
      %1594 = vmatmul.mubr.f32.gmra.mxu0 %v1468
      %v1595 = vpop.f32.mrf.mxu0
      %v1596 = vadd.f32 %v1502, %v1595
      %v1597 = vpop.f32.mrf.mxu0
      %1598 = vmatprep.mubr.f32.mxu0 0.0
      %1599 = vmatmul.mubr.f32.gmra.mxu0 %v1469
      %v1600 = vpop.f32.mrf.mxu0
      %v1601 = vadd.f32 %v1502, %v1600
      %v1602 = vpop.f32.mrf.mxu0
      %1603 = vmatprep.mubr.f32.mxu0 0.0
      %1604 = vmatmul.mubr.f32.gmra.mxu0 %v1470
      %v1605 = vpop.f32.mrf.mxu0
      %v1606 = vadd.f32 %v1502, %v1605
      %v1607 = vpop.f32.mrf.mxu0
      %1608 = vmatprep.mubr.f32.mxu0 0.0
      %1609 = vmatmul.mubr.f32.gmra.mxu0 %v1471
      %v1610 = vpop.f32.mrf.mxu0
      %v1611 = vadd.f32 %v1502, %v1610
      %v1612 = vpop.f32.mrf.mxu0
      %1613 = vmatprep.mubr.f32.mxu0 0.0
      %1614 = vmatmul.mubr.f32.gmra.mxu0 %v1472
      %v1615 = vpop.f32.mrf.mxu0
      %v1616 = vadd.f32 %v1502, %v1615
      %v1617 = vpop.f32.mrf.mxu0
      %1618 = vmatprep.mubr.f32.mxu0 0.0
      %1619 = vmatmul.mubr.f32.gmra.mxu0 %v1473
      %v1620 = vpop.f32.mrf.mxu0
      %v1621 = vadd.f32 %v1502, %v1620
      %v1622 = vpop.f32.mrf.mxu0
      %1623 = vmatprep.mubr.f32.mxu0 0.0
      %1624 = vmatmul.mubr.f32.gmra.mxu0 %v1474
      %v1625 = vpop.f32.mrf.mxu0
      %v1626 = vadd.f32 %v1502, %v1625
      %v1627 = vpop.f32.mrf.mxu0
      %1628 = vmatprep.mubr.f32.mxu0 0.0
      %1629 = vmatmul.mubr.f32.gmra.mxu0 %v1475
      %v1630 = vpop.f32.mrf.mxu0
      %v1631 = vadd.f32 %v1502, %v1630
      %v1632 = vpop.f32.mrf.mxu0
      %1633 = vmatprep.mubr.f32.mxu0 0.0
      %1634 = vmatmul.mubr.f32.gmra.mxu0 %v1476
      %v1635 = vpop.f32.mrf.mxu0
      %v1636 = vadd.f32 %v1502, %v1635
      %v1637 = vpop.f32.mrf.mxu0
      %1638 = vmatprep.mubr.f32.mxu0 0.0
      %1639 = vmatmul.mubr.f32.gmra.mxu0 %v1477
      %v1640 = vpop.f32.mrf.mxu0
      %v1641 = vadd.f32 %v1502, %v1640
      %v1642 = vpop.f32.mrf.mxu0
      %1643 = vmatprep.mubr.f32.mxu0 0.0
      %1644 = vmatmul.mubr.f32.gmra.mxu0 %v1478
      %v1645 = vpop.f32.mrf.mxu0
      %v1646 = vadd.f32 %v1502, %v1645
      %v1647 = vpop.f32.mrf.mxu0
      %1648 = vdwg.mxu0
      %v1649 = vsub.f32 0.0, %v1571
      %v1650 = vsub.f32 0.0, %v1576
      %v1651 = vsub.f32 0.0, %v1581
      %v1652 = vsub.f32 0.0, %v1586
      %v1653 = vsub.f32 0.0, %v1591
      %v1654 = vsub.f32 0.0, %v1596
      %v1655 = vsub.f32 0.0, %v1601
      %v1656 = vsub.f32 0.0, %v1606
      %v1657 = vsub.f32 0.0, %v1611
      %v1658 = vsub.f32 0.0, %v1616
      %v1659 = vsub.f32 0.0, %v1621
      %v1660 = vsub.f32 0.0, %v1626
      %v1661 = vsub.f32 0.0, %v1631
      %v1662 = vsub.f32 0.0, %v1636
      %v1663 = vsub.f32 0.0, %v1641
      %v1664 = vsub.f32 0.0, %v1646
      %v1665 = vmul.f32 %v1649, 1.442695
      %v1666 = vpow.pop %v1665
      %v1667 = vmul.f32 %v1650, 1.442695
      %v1668 = vpow.pop %v1667
      %v1669 = vmul.f32 %v1651, 1.442695
      %v1670 = vpow.pop %v1669
      %v1671 = vmul.f32 %v1652, 1.442695
      %v1672 = vpow.pop %v1671
      %v1673 = vmul.f32 %v1653, 1.442695
      %v1674 = vpow.pop %v1673
      %v1675 = vmul.f32 %v1654, 1.442695
      %v1676 = vpow.pop %v1675
      %v1677 = vmul.f32 %v1655, 1.442695
      %v1678 = vpow.pop %v1677
      %v1679 = vmul.f32 %v1656, 1.442695
      %v1680 = vpow.pop %v1679
      %v1681 = vmul.f32 %v1657, 1.442695
      %v1682 = vpow.pop %v1681
      %v1683 = vmul.f32 %v1658, 1.442695
      %v1684 = vpow.pop %v1683
      %v1685 = vmul.f32 %v1659, 1.442695
      %v1686 = vpow.pop %v1685
      %v1687 = vmul.f32 %v1660, 1.442695
      %v1688 = vpow.pop %v1687
      %v1689 = vmul.f32 %v1661, 1.442695
      %v1690 = vpow.pop %v1689
      %v1691 = vmul.f32 %v1662, 1.442695
      %v1692 = vpow.pop %v1691
      %v1693 = vmul.f32 %v1663, 1.442695
      %v1694 = vpow.pop %v1693
      %v1695 = vmul.f32 %v1664, 1.442695
      %v1696 = vpow.pop %v1695
      %v1697 = vadd.f32 %v1666, 1.0
      %v1698 = vadd.f32 %v1668, 1.0
      %v1699 = vadd.f32 %v1670, 1.0
      %v1700 = vadd.f32 %v1672, 1.0
      %v1701 = vadd.f32 %v1674, 1.0
      %v1702 = vadd.f32 %v1676, 1.0
      %v1703 = vadd.f32 %v1678, 1.0
      %v1704 = vadd.f32 %v1680, 1.0
      %v1705 = vadd.f32 %v1682, 1.0
      %v1706 = vadd.f32 %v1684, 1.0
      %v1707 = vadd.f32 %v1686, 1.0
      %v1708 = vadd.f32 %v1688, 1.0
      %v1709 = vadd.f32 %v1690, 1.0
      %v1710 = vadd.f32 %v1692, 1.0
      %v1711 = vadd.f32 %v1694, 1.0
      %v1712 = vadd.f32 %v1696, 1.0
      %v1713 = vrcp.pop %v1697
      %v1714 = vmul.f32 1.0, %v1713
      %v1715 = vrcp.pop %v1698
      %v1716 = vmul.f32 1.0, %v1715
      %v1717 = vrcp.pop %v1699
      %v1718 = vmul.f32 1.0, %v1717
      %v1719 = vrcp.pop %v1700
      %v1720 = vmul.f32 1.0, %v1719
      %v1721 = vrcp.pop %v1701
      %v1722 = vmul.f32 1.0, %v1721
      %v1723 = vrcp.pop %v1702
      %v1724 = vmul.f32 1.0, %v1723
      %v1725 = vrcp.pop %v1703
      %v1726 = vmul.f32 1.0, %v1725
      %v1727 = vrcp.pop %v1704
      %v1728 = vmul.f32 1.0, %v1727
      %v1729 = vrcp.pop %v1705
      %v1730 = vmul.f32 1.0, %v1729
      %v1731 = vrcp.pop %v1706
      %v1732 = vmul.f32 1.0, %v1731
      %v1733 = vrcp.pop %v1707
      %v1734 = vmul.f32 1.0, %v1733
      %v1735 = vrcp.pop %v1708
      %v1736 = vmul.f32 1.0, %v1735
      %v1737 = vrcp.pop %v1709
      %v1738 = vmul.f32 1.0, %v1737
      %v1739 = vrcp.pop %v1710
      %v1740 = vmul.f32 1.0, %v1739
      %v1741 = vrcp.pop %v1711
      %v1742 = vmul.f32 1.0, %v1741
      %v1743 = vrcp.pop %v1712
      %v1744 = vmul.f32 1.0, %v1743
      %v1745 = vmul.f32 %v1571, %v1714
      %v1746 = vmul.f32 %v1576, %v1716
      %v1747 = vmul.f32 %v1581, %v1718
      %v1748 = vmul.f32 %v1586, %v1720
      %v1749 = vmul.f32 %v1591, %v1722
      %v1750 = vmul.f32 %v1596, %v1724
      %v1751 = vmul.f32 %v1601, %v1726
      %v1752 = vmul.f32 %v1606, %v1728
      %v1753 = vmul.f32 %v1611, %v1730
      %v1754 = vmul.f32 %v1616, %v1732
      %v1755 = vmul.f32 %v1621, %v1734
      %v1756 = vmul.f32 %v1626, %v1736
      %v1757 = vmul.f32 %v1631, %v1738
      %v1758 = vmul.f32 %v1636, %v1740
      %v1759 = vmul.f32 %v1641, %v1742
      %v1760 = vmul.f32 %v1646, %v1744
      %v1761 = vld [vmem:[%s5] sm:$0xff]
      %v1762 = vld [vmem:[%s5 + $0x8] sm:$0xff]
      %v1763 = vld [vmem:[%s5 + $0x10] sm:$0xff]
      %v1764 = vld [vmem:[%s5 + $0x18] sm:$0xff]
      %v1765 = vld [vmem:[%s5 + $0x20] sm:$0xff]
      %v1766 = vld [vmem:[%s5 + $0x28] sm:$0xff]
      %v1767 = vld [vmem:[%s5 + $0x30] sm:$0xff]
      %v1768 = vld [vmem:[%s5 + $0x38] sm:$0xff]
      %v1769 = vld [vmem:[%s5 + $0x40] sm:$0xff]
      %v1770 = vld [vmem:[%s5 + $0x48] sm:$0xff]
      %v1771 = vld [vmem:[%s5 + $0x50] sm:$0xff]
      %v1772 = vld [vmem:[%s5 + $0x58] sm:$0xff]
      %v1773 = vld [vmem:[%s5 + $0x60] sm:$0xff]
      %v1774 = vld [vmem:[%s5 + $0x68] sm:$0xff]
      %v1775 = vld [vmem:[%s5 + $0x70] sm:$0xff]
      %v1776 = vld [vmem:[%s5 + $0x78] sm:$0xff]
      %1777 = vmatprep.subr.mxu0 0.0
      %1778 = vmatpush1.msra.mxu0 %v1776
      %1779 = vmatprep.subr.mxu0 0.0
      %1780 = vmatpush1.msra.mxu0 %v1775
      %1781 = vmatprep.subr.mxu0 0.0
      %1782 = vmatpush1.msra.mxu0 %v1774
      %1783 = vmatprep.subr.mxu0 0.0
      %1784 = vmatpush1.msra.mxu0 %v1773
      %1785 = vmatprep.subr.mxu0 0.0
      %1786 = vmatpush1.msra.mxu0 %v1772
      %1787 = vmatprep.subr.mxu0 0.0
      %1788 = vmatpush1.msra.mxu0 %v1771
      %1789 = vmatprep.subr.mxu0 0.0
      %1790 = vmatpush1.msra.mxu0 %v1770
      %1791 = vmatprep.subr.mxu0 0.0
      %1792 = vmatpush1.msra.mxu0 %v1769
      %1793 = vmatprep.subr.mxu0 0.0
      %1794 = vmatpush1.msra.mxu0 %v1768
      %1795 = vmatprep.subr.mxu0 0.0
      %1796 = vmatpush1.msra.mxu0 %v1767
      %1797 = vmatprep.subr.mxu0 0.0
      %1798 = vmatpush1.msra.mxu0 %v1766
      %1799 = vmatprep.subr.mxu0 0.0
      %1800 = vmatpush1.msra.mxu0 %v1765
      %1801 = vmatprep.subr.mxu0 0.0
      %1802 = vmatpush1.msra.mxu0 %v1764
      %1803 = vmatprep.subr.mxu0 0.0
      %1804 = vmatpush1.msra.mxu0 %v1763
      %1805 = vmatprep.subr.mxu0 0.0
      %1806 = vmatpush1.msra.mxu0 %v1762
      %1807 = vmatprep.subr.mxu0 0.0
      %1808 = vmatpush1.msra.mxu0 %v1761
      %1809 = vmatprep.subr.mxu0 0.0
      %1810 = vmatpush2.msra.mxu0 0.0
      %1811 = vmatprep.subr.mxu0 0.0
      %1812 = vmatpush2.msra.mxu0 0.0
      %1813 = vmatprep.subr.mxu0 0.0
      %1814 = vmatpush2.msra.mxu0 0.0
      %1815 = vmatprep.subr.mxu0 0.0
      %1816 = vmatpush2.msra.mxu0 0.0
      %1817 = vmatprep.subr.mxu0 0.0
      %1818 = vmatpush2.msra.mxu0 0.0
      %1819 = vmatprep.subr.mxu0 0.0
      %1820 = vmatpush2.msra.mxu0 0.0
      %1821 = vmatprep.subr.mxu0 0.0
      %1822 = vmatpush2.msra.mxu0 0.0
      %1823 = vmatprep.subr.mxu0 0.0
      %1824 = vmatpush2.msra.mxu0 0.0
      %1825 = vmatprep.subr.mxu0 0.0
      %1826 = vmatpush2.msra.mxu0 0.0
      %1827 = vmatprep.subr.mxu0 0.0
      %1828 = vmatpush2.msra.mxu0 0.0
      %1829 = vmatprep.subr.mxu0 0.0
      %1830 = vmatpush2.msra.mxu0 0.0
      %1831 = vmatprep.subr.mxu0 0.0
      %1832 = vmatpush2.msra.mxu0 0.0
      %1833 = vmatprep.subr.mxu0 0.0
      %1834 = vmatpush2.msra.mxu0 0.0
      %1835 = vmatprep.subr.mxu0 0.0
      %1836 = vmatpush2.msra.mxu0 0.0
      %1837 = vmatprep.subr.mxu0 0.0
      %1838 = vmatpush2.msra.mxu0 0.0
      %1839 = vmatprep.subr.mxu0 0.0
      %1840 = vmatpush2.msra.mxu0 0.0
      %1841 = vmatprep.mubr.f32.mxu0 0.0
      %1842 = vmatmul.mubr.f32.gmra.mxu0 %v1745
      %v1843 = vpop.f32.mrf.mxu0
      %v1844 = vadd.f32 0.0, %v1843
      %v1845 = vpop.f32.mrf.mxu0
      %1846 = vmatprep.mubr.f32.mxu0 0.0
      %1847 = vmatmul.mubr.f32.gmra.mxu0 %v1746
      %v1848 = vpop.f32.mrf.mxu0
      %v1849 = vadd.f32 0.0, %v1848
      %v1850 = vpop.f32.mrf.mxu0
      %1851 = vmatprep.mubr.f32.mxu0 0.0
      %1852 = vmatmul.mubr.f32.gmra.mxu0 %v1747
      %v1853 = vpop.f32.mrf.mxu0
      %v1854 = vadd.f32 0.0, %v1853
      %v1855 = vpop.f32.mrf.mxu0
      %1856 = vmatprep.mubr.f32.mxu0 0.0
      %1857 = vmatmul.mubr.f32.gmra.mxu0 %v1748
      %v1858 = vpop.f32.mrf.mxu0
      %v1859 = vadd.f32 0.0, %v1858
      %v1860 = vpop.f32.mrf.mxu0
      %1861 = vmatprep.mubr.f32.mxu0 0.0
      %1862 = vmatmul.mubr.f32.gmra.mxu0 %v1749
      %v1863 = vpop.f32.mrf.mxu0
      %v1864 = vadd.f32 0.0, %v1863
      %v1865 = vpop.f32.mrf.mxu0
      %1866 = vmatprep.mubr.f32.mxu0 0.0
      %1867 = vmatmul.mubr.f32.gmra.mxu0 %v1750
      %v1868 = vpop.f32.mrf.mxu0
      %v1869 = vadd.f32 0.0, %v1868
      %v1870 = vpop.f32.mrf.mxu0
      %1871 = vmatprep.mubr.f32.mxu0 0.0
      %1872 = vmatmul.mubr.f32.gmra.mxu0 %v1751
      %v1873 = vpop.f32.mrf.mxu0
      %v1874 = vadd.f32 0.0, %v1873
      %v1875 = vpop.f32.mrf.mxu0
      %1876 = vmatprep.mubr.f32.mxu0 0.0
      %1877 = vmatmul.mubr.f32.gmra.mxu0 %v1752
      %v1878 = vpop.f32.mrf.mxu0
      %v1879 = vadd.f32 0.0, %v1878
      %v1880 = vpop.f32.mrf.mxu0
      %1881 = vmatprep.mubr.f32.mxu0 0.0
      %1882 = vmatmul.mubr.f32.gmra.mxu0 %v1753
      %v1883 = vpop.f32.mrf.mxu0
      %v1884 = vadd.f32 0.0, %v1883
      %v1885 = vpop.f32.mrf.mxu0
      %1886 = vmatprep.mubr.f32.mxu0 0.0
      %1887 = vmatmul.mubr.f32.gmra.mxu0 %v1754
      %v1888 = vpop.f32.mrf.mxu0
      %v1889 = vadd.f32 0.0, %v1888
      %v1890 = vpop.f32.mrf.mxu0
      %1891 = vmatprep.mubr.f32.mxu0 0.0
      %1892 = vmatmul.mubr.f32.gmra.mxu0 %v1755
      %v1893 = vpop.f32.mrf.mxu0
      %v1894 = vadd.f32 0.0, %v1893
      %v1895 = vpop.f32.mrf.mxu0
      %1896 = vmatprep.mubr.f32.mxu0 0.0
      %1897 = vmatmul.mubr.f32.gmra.mxu0 %v1756
      %v1898 = vpop.f32.mrf.mxu0
      %v1899 = vadd.f32 0.0, %v1898
      %v1900 = vpop.f32.mrf.mxu0
      %1901 = vmatprep.mubr.f32.mxu0 0.0
      %1902 = vmatmul.mubr.f32.gmra.mxu0 %v1757
      %v1903 = vpop.f32.mrf.mxu0
      %v1904 = vadd.f32 0.0, %v1903
      %v1905 = vpop.f32.mrf.mxu0
      %1906 = vmatprep.mubr.f32.mxu0 0.0
      %1907 = vmatmul.mubr.f32.gmra.mxu0 %v1758
      %v1908 = vpop.f32.mrf.mxu0
      %v1909 = vadd.f32 0.0, %v1908
      %v1910 = vpop.f32.mrf.mxu0
      %1911 = vmatprep.mubr.f32.mxu0 0.0
      %1912 = vmatmul.mubr.f32.gmra.mxu0 %v1759
      %v1913 = vpop.f32.mrf.mxu0
      %v1914 = vadd.f32 0.0, %v1913
      %v1915 = vpop.f32.mrf.mxu0
      %1916 = vmatprep.mubr.f32.mxu0 0.0
      %1917 = vmatmul.mubr.f32.gmra.mxu0 %v1760
      %v1918 = vpop.f32.mrf.mxu0
      %v1919 = vadd.f32 0.0, %v1918
      %v1920 = vpop.f32.mrf.mxu0
      %1921 = vdwg.mxu0
      %v1922 = vld [vmem:[%s6] sm:$0x1]
      %v1924 = vlaneseq
      %v1925 = vshrl.u32 %v1924, 7
      %v1926 = vsub.s32 0, %v1925
      %v1927 = vrot.slane %v1922, %v1926
      %v1929 = vadd.f32 %v1844, %v1927
      %v1930 = vadd.f32 %v1849, %v1927
      %v1931 = vadd.f32 %v1854, %v1927
      %v1932 = vadd.f32 %v1859, %v1927
      %v1933 = vadd.f32 %v1864, %v1927
      %v1934 = vadd.f32 %v1869, %v1927
      %v1935 = vadd.f32 %v1874, %v1927
      %v1936 = vadd.f32 %v1879, %v1927
      %v1937 = vadd.f32 %v1884, %v1927
      %v1938 = vadd.f32 %v1889, %v1927
      %v1939 = vadd.f32 %v1894, %v1927
      %v1940 = vadd.f32 %v1899, %v1927
      %v1941 = vadd.f32 %v1904, %v1927
      %v1942 = vadd.f32 %v1909, %v1927
      %v1943 = vadd.f32 %v1914, %v1927
      %v1944 = vadd.f32 %v1919, %v1927
      %vm1945 = vcmask 64512
      %1946 = vst.msk [vmem:[%s280] sm:$0xff] %vm1945, %v1929
      %1947 = vst.msk [vmem:[%s280 + $0x8] sm:$0xff] %vm1945, %v1930
      %1948 = vst.msk [vmem:[%s280 + $0x10] sm:$0xff] %vm1945, %v1931
      %1949 = vst.msk [vmem:[%s280 + $0x18] sm:$0xff] %vm1945, %v1932
      %1950 = vst.msk [vmem:[%s280 + $0x20] sm:$0xff] %vm1945, %v1933
      %1951 = vst.msk [vmem:[%s280 + $0x28] sm:$0xff] %vm1945, %v1934
      %1952 = vst.msk [vmem:[%s280 + $0x30] sm:$0xff] %vm1945, %v1935
      %1953 = vst.msk [vmem:[%s280 + $0x38] sm:$0xff] %vm1945, %v1936
      %1954 = vst.msk [vmem:[%s280 + $0x40] sm:$0xff] %vm1945, %v1937
      %1955 = vst.msk [vmem:[%s280 + $0x48] sm:$0xff] %vm1945, %v1938
      %1956 = vst.msk [vmem:[%s280 + $0x50] sm:$0xff] %vm1945, %v1939
      %1957 = vst.msk [vmem:[%s280 + $0x58] sm:$0xff] %vm1945, %v1940
      %1958 = vst.msk [vmem:[%s280 + $0x60] sm:$0xff] %vm1945, %v1941
      %1959 = vst.msk [vmem:[%s280 + $0x68] sm:$0xff] %vm1945, %v1942
      %1960 = vst.msk [vmem:[%s280 + $0x70] sm:$0xff] %vm1945, %v1943
      %1961 = vst.msk [vmem:[%s280 + $0x78] sm:$0xff] %vm1945, %v1944
      %s1962 = smul.u32 16, %s18
      %p1963 = scmp.lt.s32.totalorder %s1962, 47
      %s1964 = scalar_select %p1963, %s1962, 47
      %s1965 = smul.addr %s1964, 8
      %s1966 = scalar_lea.vmem %s7, %s1965
      // Predicated region
      $region49: #{pinn_forward.1} parent=47 // pred_check
        %p1967 = pneg %p188
      $region50: #{pinn_forward.1} parent=47 // pred_check_branch
        %1969 = sbr.rel (%p1967) target = $region52
      $region51: #{pinn_forward.1} parent=47 // pred_region
        %s1970 = smul.u32 16, %s18
      $region52: #{pinn_forward.1} parent=47 // pred_fallthru
        _
    $region48: #{pinn_forward.1} parent=5 // pred_fallthru
      _
    %p1971 = scmp.le.s32.totalorder 2, %s13
    // Predicated region
    $region53: #{pinn_forward.1} parent=5 // pred_check
      %p1972 = pneg %p1971
    $region54: #{pinn_forward.1} parent=5 // pred_check_branch
      %1974 = sbr.rel (%p1972) target = $region56
    $region55: #{pinn_forward.1} parent=5 // pred_region
      %s1975 = ssub.s32 %s13, 2
      // Predicated region
      $region57: #{pinn_forward.1} parent=55 // pred_check
        %p1976 = pneg %p194
      $region58: #{pinn_forward.1} parent=55 // pred_check_branch
        %1978 = sbr.rel (%p1976) target = $region60
      $region59: #{pinn_forward.1} parent=55 // pred_region
        %s1979 = smul.u32 16, %s19
        %p1980 = scmp.lt.s32.totalorder %s1979, 47
        %s1981 = scalar_select %p1980, %s1979, 47
        %s1982 = smul.addr %s1981, 8
        %s1983 = scalar_lea.vmem %s7, %s1982
      $region60: #{pinn_forward.1} parent=55 // pred_fallthru
        _
    $region56: #{pinn_forward.1} parent=5 // pred_fallthru
      _
  $region6: #{pinn_forward.1} parent=0 // loop_footer
    %s17 = sadd.s32 1, %s13
  $region7: #{pinn_forward.1} parent=0 // loop_footer_branch
    %12 = sbr.rel target = $region3
  $region8: #{pinn_forward.1} parent=0 // loop_exit
    _

</llo_original>
